<compile_context>
chip_gen: v5e
topology: v5e:2x2
jax: 0.10.0
libtpu: 0.0.40
codegen_flags: <defaults>
</compile_context>

<pallas_src>
import functools

import jax
import jax.numpy as jnp
from jax.experimental import pallas as pl
from jax.experimental.pallas import tpu as pltpu


def _round_up(x, m):
    return (x + m - 1) // m * m


def _pad_to(a, shape):
    pads = [(0, s - d) for d, s in zip(a.shape, shape)]
    if any(hi for _, hi in pads):
        a = jnp.pad(a, pads)
    return a


# ---------------------------------------------------------------------------
# Pallas kernel: tiled GEMM + bias + ReLU (+ fused 2x2 max-pool over G axis)
# ---------------------------------------------------------------------------
def _gemm_kernel(x_ref, w_ref, b_ref, o_ref, acc_ref, *, relu):
    g = pl.program_id(2)            # pooling-window corner (size 1 when no pool)
    k = pl.program_id(3)            # reduction step

    @pl.when(k == 0)
    def _init():
        acc_ref[...] = jnp.zeros_like(acc_ref)

    acc_ref[...] += jnp.dot(x_ref[0], w_ref[...],
                            preferred_element_type=jnp.float32)

    @pl.when(k == pl.num_programs(3) - 1)
    def _finalize():
        val = acc_ref[...] + b_ref[...]          # f32 epilogue
        if relu:
            val = jnp.maximum(val, 0.0)
        val = val.astype(o_ref.dtype)

        @pl.when(g == 0)
        def _first_corner():
            o_ref[...] = val

        @pl.when(g > 0)                          # max-pool into resident block
        def _other_corners():
            o_ref[...] = jnp.maximum(o_ref[...], val)


def gemm_bias_act(x, w, b, *, relu, out_dtype=jnp.bfloat16):
    """y = act(x @ w + b); if x is (G, M, K), additionally max-reduces over G.

    MXU operands are bf16, accumulation is f32. All dims are zero-padded to
    (8,128)-aligned tiles (padding never changes the valid results); padded
    rows/cols are sliced off on return.
    """
    if x.ndim == 2:
        x = x[None]
    G, M, K = x.shape
    Kw, N = w.shape
    assert Kw == K, (x.shape, w.shape)

    tm = 128 if M >= 128 else _round_up(M, 8)
    tn = 128
    tk = 512 if K > 512 else _round_up(K, 128)
    Mp, Np, Kp = _round_up(M, tm), _round_up(N, tn), _round_up(K, tk)

    xp = _pad_to(x.astype(jnp.bfloat16), (G, Mp, Kp))
    wp = _pad_to(w.astype(jnp.bfloat16), (Kp, Np))
    bp = _pad_to(b.astype(jnp.float32).reshape(1, N), (1, Np))

    grid = (Mp // tm, Np // tn, G, Kp // tk)
    out = pl.pallas_call(
        functools.partial(_gemm_kernel, relu=relu),
        grid=grid,
        in_specs=[
            pl.BlockSpec((1, tm, tk), lambda i, j, g, k: (g, i, k)),
            pl.BlockSpec((tk, tn), lambda i, j, g, k: (k, j)),
            pl.BlockSpec((1, tn), lambda i, j, g, k: (0, j)),
        ],
        out_specs=pl.BlockSpec((tm, tn), lambda i, j, g, k: (i, j)),
        out_shape=jax.ShapeDtypeStruct((Mp, Np), out_dtype),
        scratch_shapes=[pltpu.VMEM((tm, tn), jnp.float32)],
        compiler_params=pltpu.CompilerParams(
            dimension_semantics=("parallel", "parallel", "arbitrary", "arbitrary"),
            vmem_limit_bytes=32 * 1024 * 1024,
        ),
    )(xp, wp, bp)
    return out[:M, :N]


# ---------------------------------------------------------------------------
# Glue (layout plumbing in plain JAX, NHWC end-to-end)
# ---------------------------------------------------------------------------
def _im2col_nhwc(x, kh, kw):
    """(N, H, W, C) -> (N, Ho, Wo, kh*kw*C); feature index = (di*kw + dj)*C + c."""
    n, h, w, c = x.shape
    ho, wo = h - kh + 1, w - kw + 1
    patches = [x[:, di:di + ho, dj:dj + wo, :]
               for di in range(kh) for dj in range(kw)]
    return jnp.stack(patches, axis=3).reshape(n, ho, wo, kh * kw * c)


def cnn_forward(x_nchw, p):
    """x_nchw: (N, 1, 28, 28) f32 -> logits (N, 10) f32 (torch CNN.forward, eval)."""
    nb = x_nchw.shape[0]
    x = x_nchw.transpose(0, 2, 3, 1)                        # NHWC (C=1: free)

    # Conv2d(1, 32, 3) + ReLU
    p1 = _im2col_nhwc(x, 3, 3).reshape(nb * 26 * 26, 9)
    y1 = gemm_bias_act(p1, p["conv1_w"], p["conv1_b"], relu=True)
    y1 = y1.reshape(nb, 26, 26, 32)

    # Conv2d(32, 64, 3) + ReLU + MaxPool2d(2): single fused GEMM, with the four
    # 2x2-window corners forming the kernel's G axis.
    p2 = _im2col_nhwc(y1, 3, 3)                             # (N, 24, 24, 288)
    corners = jnp.stack(
        [p2[:, dh::2, dw::2, :].reshape(nb * 144, 288)
         for dh in range(2) for dw in range(2)], axis=0)    # (4, N*144, 288)
    pooled = gemm_bias_act(corners, p["conv2_w"], p["conv2_b"], relu=True)  # (N*144, 64)

    # Dropout(0.25): identity (eval). Flatten in NHWC order; fc1 weight columns
    # were permuted at prep time so this matches torch's NCHW flatten.
    flat = pooled.reshape(nb, 144 * 64)                     # (N, 9216)

    h = gemm_bias_act(flat, p["fc1_w"], p["fc1_b"], relu=True)              # (N, 128)
    # Dropout(0.5): identity (eval).
    return gemm_bias_act(h, p["fc2_w"], p["fc2_b"], relu=False,
                         out_dtype=jnp.float32)                             # (N, 10)


# ---------------------------------------------------------------------------
# Parameters (PyTorch shapes) + one-time GEMM-friendly relayout
# ---------------------------------------------------------------------------
def init_params(key):
    ks = jax.random.split(key, 8)

    def u(k, shape, fan_in):
        bound = 1.0 / float(fan_in) ** 0.5
        return jax.random.uniform(k, shape, jnp.float32, -bound, bound)

    return {
        "conv1_w": u(ks[0], (32, 1, 3, 3), 1 * 9),
        "conv1_b": u(ks[1], (32,), 1 * 9),
        "conv2_w": u(ks[2], (64, 32, 3, 3), 32 * 9),
        "conv2_b": u(ks[3], (64,), 32 * 9),
        "fc1_w": u(ks[4], (128, 9216), 9216),
        "fc1_b": u(ks[5], (128,), 9216),
        "fc2_w": u(ks[6], (10, 128), 128),
        "fc2_b": u(ks[7], (10,), 128),
    }


def prepare_params(params):
    """One-time weight relayout (no per-forward transposes)."""
    conv1_w = params["conv1_w"].transpose(2, 3, 1, 0).reshape(9 * 1, 32)    # (kh*kw*Cin, Cout)
    conv2_w = params["conv2_w"].transpose(2, 3, 1, 0).reshape(9 * 32, 64)
    # fc1 columns: c*144 + hp*12 + wp (NCHW flatten) -> (hp*12 + wp)*64 + c (NHWC flatten)
    fc1_w = (params["fc1_w"].reshape(128, 64, 12, 12)
             .transpose(0, 2, 3, 1).reshape(128, 9216).T)                   # (9216, 128)
    fc2_w = params["fc2_w"].T                                               # (128, 10)
    return {
        "conv1_w": conv1_w, "conv1_b": params["conv1_b"],
        "conv2_w": conv2_w, "conv2_b": params["conv2_b"],
        "fc1_w": fc1_w, "fc1_b": params["fc1_b"],
        "fc2_w": fc2_w, "fc2_b": params["fc2_b"],
    }


# ---------------------------------------------------------------------------
# Pure-XLA reference with matching numerics (bf16 operands, f32 accumulate)
# ---------------------------------------------------------------------------
def reference_forward(x, params):
    dn = ("NCHW", "OIHW", "NCHW")

    def conv(v, w):
        return jax.lax.conv_general_dilated(
            v.astype(jnp.bfloat16), w.astype(jnp.bfloat16), (1, 1), "VALID",
            dimension_numbers=dn, preferred_element_type=jnp.float32)

    y = conv(x, params["conv1_w"]) + params["conv1_b"][None, :, None, None]
    y = jnp.maximum(y, 0.0).astype(jnp.bfloat16)
    y = conv(y, params["conv2_w"]) + params["conv2_b"][None, :, None, None]
    y = jnp.maximum(y, 0.0).astype(jnp.bfloat16)
    n = y.shape[0]
    y = y.reshape(n, 64, 12, 2, 12, 2).max(axis=(3, 5))     # MaxPool2d(2)
    y = y.reshape(n, -1)
    y = jnp.dot(y, params["fc1_w"].T.astype(jnp.bfloat16),
                preferred_element_type=jnp.float32) + params["fc1_b"]
    y = jnp.maximum(y, 0.0).astype(jnp.bfloat16)
    y = jnp.dot(y, params["fc2_w"].T.astype(jnp.bfloat16),
                preferred_element_type=jnp.float32) + params["fc2_b"]
    return y


if __name__ == "__main__":
    key = jax.random.PRNGKey(0)
    pkey, xkey = jax.random.split(key)
    params = init_params(pkey)
    prepped = prepare_params(params)

    # MNIST-style input forced by Linear(64*12*12, 128): (N, 1, 28, 28)
    x = jax.random.normal(xkey, (2, 1, 28, 28), jnp.float32)

    forward = jax.jit(cnn_forward)
    out = jax.block_until_ready(forward(x, prepped))
    assert out.shape == (2, 10), out.shape

    ref = reference_forward(x, params)
    max_err = float(jnp.max(jnp.abs(out - ref)))
    if not bool(jnp.allclose(out, ref, atol=2e-2, rtol=2e-2)):
        raise AssertionError(f"mismatch vs reference: max abs diff = {max_err}")

    print("KERNEL_OK")
</pallas_src>

<mosaic_0001>
module attributes {stable_mosaic.version = 11 : i64} {
  func.func @_gemm_kernel(%arg0: i32, %arg1: i32, %arg2: i32, %arg3: i32, %arg4: memref<1x128x128xbf16, #tpu.memory_space<vmem>>, %arg5: memref<128x128xbf16, #tpu.memory_space<vmem>>, %arg6: memref<1x128xf32, #tpu.memory_space<vmem>>, %arg7: memref<128x128xbf16, #tpu.memory_space<vmem>>, %arg8: memref<128x128xf32, #tpu.memory_space<vmem>>) attributes {dimension_semantics = [#tpu.dimension_semantics<parallel>, #tpu.dimension_semantics<parallel>, #tpu.dimension_semantics<arbitrary>, #tpu.dimension_semantics<arbitrary>], iteration_bounds = array<i64: 11, 1, 1, 1>, scalar_prefetch = 0 : i64, scratch_operands = 1 : i64, tpu.core_type = #tpu.core_type<tc>, window_params = [{transform_indices = @transform_0, window_bounds = array<i64: 1, 128, 128>}, {transform_indices = @transform_1, window_bounds = array<i64: 128, 128>}, {transform_indices = @transform_2, window_bounds = array<i64: 1, 128>}, {transform_indices = @transform_3, window_bounds = array<i64: 128, 128>}]} {
    %c0_i32 = arith.constant 0 : i32
    %0 = arith.cmpi eq, %arg3, %c0_i32 : i32
    %1 = arith.extui %0 : i1 to i32
    %c0_i32_0 = arith.constant 0 : i32
    %2 = arith.cmpi ne, %1, %c0_i32_0 : i32
    scf.if %2 {
      %cst_11 = arith.constant 0.000000e+00 : f32
      %13 = vector.broadcast %cst_11 : f32 to vector<128x128xf32>
      %c0_12 = arith.constant 0 : index
      %c0_13 = arith.constant 0 : index
      %14 = vector.load %arg8[%c0_12, %c0_13] : memref<128x128xf32, #tpu.memory_space<vmem>>, vector<128x128xf32>
      tpu.vector_store %arg8[%c0_12, %c0_13], %13 {strides = array<i32>} : memref<128x128xf32, #tpu.memory_space<vmem>>, vector<128x128xf32>,
    } else {
    }
    %c0 = arith.constant 0 : index
    %c0_1 = arith.constant 0 : index
    %3 = vector.load %arg8[%c0, %c0_1] : memref<128x128xf32, #tpu.memory_space<vmem>>, vector<128x128xf32>
    %c0_2 = arith.constant 0 : index
    %c0_3 = arith.constant 0 : index
    %c0_4 = arith.constant 0 : index
    %4 = vector.load %arg4[%c0_2, %c0_3, %c0_4] : memref<1x128x128xbf16, #tpu.memory_space<vmem>>, vector<1x128x128xbf16>
    %5 = vector.shape_cast %4 : vector<1x128x128xbf16> to vector<128x128xbf16>
    %c0_5 = arith.constant 0 : index
    %c0_6 = arith.constant 0 : index
    %6 = vector.load %arg5[%c0_5, %c0_6] : memref<128x128xbf16, #tpu.memory_space<vmem>>, vector<128x128xbf16>
    %cst = arith.constant dense<0.000000e+00> : vector<128x128xf32>
    %7 = tpu.matmul %5, %6, %cst {dimension_numbers = #tpu.dot_dimension_numbers<[1], [0], [0], [1], [0, 0, 1, 1], [], []>} : vector<128x128xbf16>, vector<128x128xbf16>, vector<128x128xf32> -> vector<128x128xf32>
    %8 = arith.addf %3, %7 : vector<128x128xf32>
    %c0_7 = arith.constant 0 : index
    %c0_8 = arith.constant 0 : index
    %9 = vector.load %arg8[%c0_7, %c0_8] : memref<128x128xf32, #tpu.memory_space<vmem>>, vector<128x128xf32>
    tpu.vector_store %arg8[%c0_7, %c0_8], %8 {strides = array<i32>} : memref<128x128xf32, #tpu.memory_space<vmem>>, vector<128x128xf32>,
    %c0_i32_9 = arith.constant 0 : i32
    %10 = arith.cmpi eq, %arg3, %c0_i32_9 : i32
    %11 = arith.extui %10 : i1 to i32
    %c0_i32_10 = arith.constant 0 : i32
    %12 = arith.cmpi ne, %11, %c0_i32_10 : i32
    scf.if %12 {
      %c0_11 = arith.constant 0 : index
      %c0_12 = arith.constant 0 : index
      %13 = vector.load %arg8[%c0_11, %c0_12] : memref<128x128xf32, #tpu.memory_space<vmem>>, vector<128x128xf32>
      %c0_13 = arith.constant 0 : index
      %c0_14 = arith.constant 0 : index
      %14 = vector.load %arg6[%c0_13, %c0_14] : memref<1x128xf32, #tpu.memory_space<vmem>>, vector<1x128xf32>
      %15 = vector.broadcast %14 : vector<1x128xf32> to vector<128x128xf32>
      %16 = arith.addf %13, %15 : vector<128x128xf32>
      %cst_15 = arith.constant 0.000000e+00 : f32
      %17 = vector.broadcast %cst_15 : f32 to vector<128x128xf32>
      %18 = arith.maximumf %16, %17 : vector<128x128xf32>
      %19 = arith.truncf %18 : vector<128x128xf32> to vector<128x128xbf16>
      %c0_i32_16 = arith.constant 0 : i32
      %20 = arith.cmpi eq, %arg2, %c0_i32_16 : i32
      %21 = arith.extui %20 : i1 to i32
      %c0_i32_17 = arith.constant 0 : i32
      %22 = arith.cmpi ne, %21, %c0_i32_17 : i32
      scf.if %22 {
        %c0_20 = arith.constant 0 : index
        %c0_21 = arith.constant 0 : index
        %26 = vector.load %arg7[%c0_20, %c0_21] : memref<128x128xbf16, #tpu.memory_space<vmem>>, vector<128x128xbf16>
        tpu.vector_store %arg7[%c0_20, %c0_21], %19 {strides = array<i32>} : memref<128x128xbf16, #tpu.memory_space<vmem>>, vector<128x128xbf16>,
      } else {
      }
      %c0_i32_18 = arith.constant 0 : i32
      %23 = arith.cmpi sgt, %arg2, %c0_i32_18 : i32
      %24 = arith.extui %23 : i1 to i32
      %c0_i32_19 = arith.constant 0 : i32
      %25 = arith.cmpi ne, %24, %c0_i32_19 : i32
      scf.if %25 {
        %c0_20 = arith.constant 0 : index
        %c0_21 = arith.constant 0 : index
        %26 = vector.load %arg7[%c0_20, %c0_21] : memref<128x128xbf16, #tpu.memory_space<vmem>>, vector<128x128xbf16>
        %27 = arith.maximumf %26, %19 : vector<128x128xbf16>
        %c0_22 = arith.constant 0 : index
        %c0_23 = arith.constant 0 : index
        %28 = vector.load %arg7[%c0_22, %c0_23] : memref<128x128xbf16, #tpu.memory_space<vmem>>, vector<128x128xbf16>
        tpu.vector_store %arg7[%c0_22, %c0_23], %27 {strides = array<i32>} : memref<128x128xbf16, #tpu.memory_space<vmem>>, vector<128x128xbf16>,
      } else {
      }
    } else {
    }
    return
  }
  func.func @transform_0(%arg0: i32, %arg1: i32, %arg2: i32, %arg3: i32) -> (i32, i32, i32) {
    %c0_i32 = arith.constant 0 : i32
    return %arg2, %arg0, %arg3 : i32, i32, i32
  }
  func.func @transform_1(%arg0: i32, %arg1: i32, %arg2: i32, %arg3: i32) -> (i32, i32) {
    %c0_i32 = arith.constant 0 : i32
    return %arg3, %arg1 : i32, i32
  }
  func.func @transform_2(%arg0: i32, %arg1: i32, %arg2: i32, %arg3: i32) -> (i32, i32) {
    %c0_i32 = arith.constant 0 : i32
    %c0_i32_0 = arith.constant 0 : i32
    return %c0_i32, %arg1 : i32, i32
  }
  func.func @transform_3(%arg0: i32, %arg1: i32, %arg2: i32, %arg3: i32) -> (i32, i32) {
    %c0_i32 = arith.constant 0 : i32
    return %arg0, %arg1 : i32, i32
  }
}

module attributes {stable_mosaic.version = 11 : i64} {
  func.func @_gemm_kernel(%arg0: i32, %arg1: i32, %arg2: i32, %arg3: i32, %arg4: memref<1x128x384xbf16, #tpu.memory_space<vmem>>, %arg5: memref<384x128xbf16, #tpu.memory_space<vmem>>, %arg6: memref<1x128xf32, #tpu.memory_space<vmem>>, %arg7: memref<128x128xbf16, #tpu.memory_space<vmem>>, %arg8: memref<128x128xf32, #tpu.memory_space<vmem>>) attributes {dimension_semantics = [#tpu.dimension_semantics<parallel>, #tpu.dimension_semantics<parallel>, #tpu.dimension_semantics<arbitrary>, #tpu.dimension_semantics<arbitrary>], iteration_bounds = array<i64: 3, 1, 4, 1>, scalar_prefetch = 0 : i64, scratch_operands = 1 : i64, tpu.core_type = #tpu.core_type<tc>, window_params = [{transform_indices = @transform_0, window_bounds = array<i64: 1, 128, 384>}, {transform_indices = @transform_1, window_bounds = array<i64: 384, 128>}, {transform_indices = @transform_2, window_bounds = array<i64: 1, 128>}, {transform_indices = @transform_3, window_bounds = array<i64: 128, 128>}]} {
    %c0_i32 = arith.constant 0 : i32
    %0 = arith.cmpi eq, %arg3, %c0_i32 : i32
    %1 = arith.extui %0 : i1 to i32
    %c0_i32_0 = arith.constant 0 : i32
    %2 = arith.cmpi ne, %1, %c0_i32_0 : i32
    scf.if %2 {
      %cst_11 = arith.constant 0.000000e+00 : f32
      %13 = vector.broadcast %cst_11 : f32 to vector<128x128xf32>
      %c0_12 = arith.constant 0 : index
      %c0_13 = arith.constant 0 : index
      %14 = vector.load %arg8[%c0_12, %c0_13] : memref<128x128xf32, #tpu.memory_space<vmem>>, vector<128x128xf32>
      tpu.vector_store %arg8[%c0_12, %c0_13], %13 {strides = array<i32>} : memref<128x128xf32, #tpu.memory_space<vmem>>, vector<128x128xf32>,
    } else {
    }
    %c0 = arith.constant 0 : index
    %c0_1 = arith.constant 0 : index
    %3 = vector.load %arg8[%c0, %c0_1] : memref<128x128xf32, #tpu.memory_space<vmem>>, vector<128x128xf32>
    %c0_2 = arith.constant 0 : index
    %c0_3 = arith.constant 0 : index
    %c0_4 = arith.constant 0 : index
    %4 = vector.load %arg4[%c0_2, %c0_3, %c0_4] : memref<1x128x384xbf16, #tpu.memory_space<vmem>>, vector<1x128x384xbf16>
    %5 = vector.shape_cast %4 : vector<1x128x384xbf16> to vector<128x384xbf16>
    %c0_5 = arith.constant 0 : index
    %c0_6 = arith.constant 0 : index
    %6 = vector.load %arg5[%c0_5, %c0_6] : memref<384x128xbf16, #tpu.memory_space<vmem>>, vector<384x128xbf16>
    %cst = arith.constant dense<0.000000e+00> : vector<128x128xf32>
    %7 = tpu.matmul %5, %6, %cst {dimension_numbers = #tpu.dot_dimension_numbers<[1], [0], [0], [1], [0, 0, 1, 1], [], []>} : vector<128x384xbf16>, vector<384x128xbf16>, vector<128x128xf32> -> vector<128x128xf32>
    %8 = arith.addf %3, %7 : vector<128x128xf32>
    %c0_7 = arith.constant 0 : index
    %c0_8 = arith.constant 0 : index
    %9 = vector.load %arg8[%c0_7, %c0_8] : memref<128x128xf32, #tpu.memory_space<vmem>>, vector<128x128xf32>
    tpu.vector_store %arg8[%c0_7, %c0_8], %8 {strides = array<i32>} : memref<128x128xf32, #tpu.memory_space<vmem>>, vector<128x128xf32>,
    %c0_i32_9 = arith.constant 0 : i32
    %10 = arith.cmpi eq, %arg3, %c0_i32_9 : i32
    %11 = arith.extui %10 : i1 to i32
    %c0_i32_10 = arith.constant 0 : i32
    %12 = arith.cmpi ne, %11, %c0_i32_10 : i32
    scf.if %12 {
      %c0_11 = arith.constant 0 : index
      %c0_12 = arith.constant 0 : index
      %13 = vector.load %arg8[%c0_11, %c0_12] : memref<128x128xf32, #tpu.memory_space<vmem>>, vector<128x128xf32>
      %c0_13 = arith.constant 0 : index
      %c0_14 = arith.constant 0 : index
      %14 = vector.load %arg6[%c0_13, %c0_14] : memref<1x128xf32, #tpu.memory_space<vmem>>, vector<1x128xf32>
      %15 = vector.broadcast %14 : vector<1x128xf32> to vector<128x128xf32>
      %16 = arith.addf %13, %15 : vector<128x128xf32>
      %cst_15 = arith.constant 0.000000e+00 : f32
      %17 = vector.broadcast %cst_15 : f32 to vector<128x128xf32>
      %18 = arith.maximumf %16, %17 : vector<128x128xf32>
      %19 = arith.truncf %18 : vector<128x128xf32> to vector<128x128xbf16>
      %c0_i32_16 = arith.constant 0 : i32
      %20 = arith.cmpi eq, %arg2, %c0_i32_16 : i32
      %21 = arith.extui %20 : i1 to i32
      %c0_i32_17 = arith.constant 0 : i32
      %22 = arith.cmpi ne, %21, %c0_i32_17 : i32
      scf.if %22 {
        %c0_20 = arith.constant 0 : index
        %c0_21 = arith.constant 0 : index
        %26 = vector.load %arg7[%c0_20, %c0_21] : memref<128x128xbf16, #tpu.memory_space<vmem>>, vector<128x128xbf16>
        tpu.vector_store %arg7[%c0_20, %c0_21], %19 {strides = array<i32>} : memref<128x128xbf16, #tpu.memory_space<vmem>>, vector<128x128xbf16>,
      } else {
      }
      %c0_i32_18 = arith.constant 0 : i32
      %23 = arith.cmpi sgt, %arg2, %c0_i32_18 : i32
      %24 = arith.extui %23 : i1 to i32
      %c0_i32_19 = arith.constant 0 : i32
      %25 = arith.cmpi ne, %24, %c0_i32_19 : i32
      scf.if %25 {
        %c0_20 = arith.constant 0 : index
        %c0_21 = arith.constant 0 : index
        %26 = vector.load %arg7[%c0_20, %c0_21] : memref<128x128xbf16, #tpu.memory_space<vmem>>, vector<128x128xbf16>
        %27 = arith.maximumf %26, %19 : vector<128x128xbf16>
        %c0_22 = arith.constant 0 : index
        %c0_23 = arith.constant 0 : index
        %28 = vector.load %arg7[%c0_22, %c0_23] : memref<128x128xbf16, #tpu.memory_space<vmem>>, vector<128x128xbf16>
        tpu.vector_store %arg7[%c0_22, %c0_23], %27 {strides = array<i32>} : memref<128x128xbf16, #tpu.memory_space<vmem>>, vector<128x128xbf16>,
      } else {
      }
    } else {
    }
    return
  }
  func.func @transform_0(%arg0: i32, %arg1: i32, %arg2: i32, %arg3: i32) -> (i32, i32, i32) {
    %c0_i32 = arith.constant 0 : i32
    return %arg2, %arg0, %arg3 : i32, i32, i32
  }
  func.func @transform_1(%arg0: i32, %arg1: i32, %arg2: i32, %arg3: i32) -> (i32, i32) {
    %c0_i32 = arith.constant 0 : i32
    return %arg3, %arg1 : i32, i32
  }
  func.func @transform_2(%arg0: i32, %arg1: i32, %arg2: i32, %arg3: i32) -> (i32, i32) {
    %c0_i32 = arith.constant 0 : i32
    %c0_i32_0 = arith.constant 0 : i32
    return %c0_i32, %arg1 : i32, i32
  }
  func.func @transform_3(%arg0: i32, %arg1: i32, %arg2: i32, %arg3: i32) -> (i32, i32) {
    %c0_i32 = arith.constant 0 : i32
    return %arg0, %arg1 : i32, i32
  }
}

module attributes {stable_mosaic.version = 11 : i64} {
  func.func @_gemm_kernel(%arg0: i32, %arg1: i32, %arg2: i32, %arg3: i32, %arg4: memref<1x8x512xbf16, #tpu.memory_space<vmem>>, %arg5: memref<512x128xbf16, #tpu.memory_space<vmem>>, %arg6: memref<1x128xf32, #tpu.memory_space<vmem>>, %arg7: memref<8x128xbf16, #tpu.memory_space<vmem>>, %arg8: memref<8x128xf32, #tpu.memory_space<vmem>>) attributes {dimension_semantics = [#tpu.dimension_semantics<parallel>, #tpu.dimension_semantics<parallel>, #tpu.dimension_semantics<arbitrary>, #tpu.dimension_semantics<arbitrary>], iteration_bounds = array<i64: 1, 1, 1, 18>, scalar_prefetch = 0 : i64, scratch_operands = 1 : i64, tpu.core_type = #tpu.core_type<tc>, window_params = [{transform_indices = @transform_0, window_bounds = array<i64: 1, 8, 512>}, {transform_indices = @transform_1, window_bounds = array<i64: 512, 128>}, {transform_indices = @transform_2, window_bounds = array<i64: 1, 128>}, {transform_indices = @transform_3, window_bounds = array<i64: 8, 128>}]} {
    %c0_i32 = arith.constant 0 : i32
    %0 = arith.cmpi eq, %arg3, %c0_i32 : i32
    %1 = arith.extui %0 : i1 to i32
    %c0_i32_0 = arith.constant 0 : i32
    %2 = arith.cmpi ne, %1, %c0_i32_0 : i32
    scf.if %2 {
      %cst_10 = arith.constant 0.000000e+00 : f32
      %13 = vector.broadcast %cst_10 : f32 to vector<8x128xf32>
      %c0_11 = arith.constant 0 : index
      %c0_12 = arith.constant 0 : index
      %14 = vector.load %arg8[%c0_11, %c0_12] : memref<8x128xf32, #tpu.memory_space<vmem>>, vector<8x128xf32>
      tpu.vector_store %arg8[%c0_11, %c0_12], %13 {strides = array<i32>} : memref<8x128xf32, #tpu.memory_space<vmem>>, vector<8x128xf32>,
    } else {
    }
    %c0 = arith.constant 0 : index
    %c0_1 = arith.constant 0 : index
    %3 = vector.load %arg8[%c0, %c0_1] : memref<8x128xf32, #tpu.memory_space<vmem>>, vector<8x128xf32>
    %c0_2 = arith.constant 0 : index
    %c0_3 = arith.constant 0 : index
    %c0_4 = arith.constant 0 : index
    %4 = vector.load %arg4[%c0_2, %c0_3, %c0_4] : memref<1x8x512xbf16, #tpu.memory_space<vmem>>, vector<1x8x512xbf16>
    %5 = vector.shape_cast %4 : vector<1x8x512xbf16> to vector<8x512xbf16>
    %c0_5 = arith.constant 0 : index
    %c0_6 = arith.constant 0 : index
    %6 = vector.load %arg5[%c0_5, %c0_6] : memref<512x128xbf16, #tpu.memory_space<vmem>>, vector<512x128xbf16>
    %cst = arith.constant dense<0.000000e+00> : vector<8x128xf32>
    %7 = tpu.matmul %5, %6, %cst {dimension_numbers = #tpu.dot_dimension_numbers<[1], [0], [0], [1], [0, 0, 1, 1], [], []>} : vector<8x512xbf16>, vector<512x128xbf16>, vector<8x128xf32> -> vector<8x128xf32>
    %8 = arith.addf %3, %7 : vector<8x128xf32>
    %c0_7 = arith.constant 0 : index
    %c0_8 = arith.constant 0 : index
    %9 = vector.load %arg8[%c0_7, %c0_8] : memref<8x128xf32, #tpu.memory_space<vmem>>, vector<8x128xf32>
    tpu.vector_store %arg8[%c0_7, %c0_8], %8 {strides = array<i32>} : memref<8x128xf32, #tpu.memory_space<vmem>>, vector<8x128xf32>,
    %c17_i32 = arith.constant 17 : i32
    %10 = arith.cmpi eq, %arg3, %c17_i32 : i32
    %11 = arith.extui %10 : i1 to i32
    %c0_i32_9 = arith.constant 0 : i32
    %12 = arith.cmpi ne, %11, %c0_i32_9 : i32
    scf.if %12 {
      %c0_10 = arith.constant 0 : index
      %c0_11 = arith.constant 0 : index
      %13 = vector.load %arg8[%c0_10, %c0_11] : memref<8x128xf32, #tpu.memory_space<vmem>>, vector<8x128xf32>
      %c0_12 = arith.constant 0 : index
      %c0_13 = arith.constant 0 : index
      %14 = vector.load %arg6[%c0_12, %c0_13] : memref<1x128xf32, #tpu.memory_space<vmem>>, vector<1x128xf32>
      %15 = vector.broadcast %14 : vector<1x128xf32> to vector<8x128xf32>
      %16 = arith.addf %13, %15 : vector<8x128xf32>
      %cst_14 = arith.constant 0.000000e+00 : f32
      %17 = vector.broadcast %cst_14 : f32 to vector<8x128xf32>
      %18 = arith.maximumf %16, %17 : vector<8x128xf32>
      %19 = arith.truncf %18 : vector<8x128xf32> to vector<8x128xbf16>
      %c0_i32_15 = arith.constant 0 : i32
      %20 = arith.cmpi eq, %arg2, %c0_i32_15 : i32
      %21 = arith.extui %20 : i1 to i32
      %c0_i32_16 = arith.constant 0 : i32
      %22 = arith.cmpi ne, %21, %c0_i32_16 : i32
      scf.if %22 {
        %c0_19 = arith.constant 0 : index
        %c0_20 = arith.constant 0 : index
        %26 = vector.load %arg7[%c0_19, %c0_20] : memref<8x128xbf16, #tpu.memory_space<vmem>>, vector<8x128xbf16>
        tpu.vector_store %arg7[%c0_19, %c0_20], %19 {strides = array<i32>} : memref<8x128xbf16, #tpu.memory_space<vmem>>, vector<8x128xbf16>,
      } else {
      }
      %c0_i32_17 = arith.constant 0 : i32
      %23 = arith.cmpi sgt, %arg2, %c0_i32_17 : i32
      %24 = arith.extui %23 : i1 to i32
      %c0_i32_18 = arith.constant 0 : i32
      %25 = arith.cmpi ne, %24, %c0_i32_18 : i32
      scf.if %25 {
        %c0_19 = arith.constant 0 : index
        %c0_20 = arith.constant 0 : index
        %26 = vector.load %arg7[%c0_19, %c0_20] : memref<8x128xbf16, #tpu.memory_space<vmem>>, vector<8x128xbf16>
        %27 = arith.maximumf %26, %19 : vector<8x128xbf16>
        %c0_21 = arith.constant 0 : index
        %c0_22 = arith.constant 0 : index
        %28 = vector.load %arg7[%c0_21, %c0_22] : memref<8x128xbf16, #tpu.memory_space<vmem>>, vector<8x128xbf16>
        tpu.vector_store %arg7[%c0_21, %c0_22], %27 {strides = array<i32>} : memref<8x128xbf16, #tpu.memory_space<vmem>>, vector<8x128xbf16>,
      } else {
      }
    } else {
    }
    return
  }
  func.func @transform_0(%arg0: i32, %arg1: i32, %arg2: i32, %arg3: i32) -> (i32, i32, i32) {
    %c0_i32 = arith.constant 0 : i32
    return %arg2, %arg0, %arg3 : i32, i32, i32
  }
  func.func @transform_1(%arg0: i32, %arg1: i32, %arg2: i32, %arg3: i32) -> (i32, i32) {
    %c0_i32 = arith.constant 0 : i32
    return %arg3, %arg1 : i32, i32
  }
  func.func @transform_2(%arg0: i32, %arg1: i32, %arg2: i32, %arg3: i32) -> (i32, i32) {
    %c0_i32 = arith.constant 0 : i32
    %c0_i32_0 = arith.constant 0 : i32
    return %c0_i32, %arg1 : i32, i32
  }
  func.func @transform_3(%arg0: i32, %arg1: i32, %arg2: i32, %arg3: i32) -> (i32, i32) {
    %c0_i32 = arith.constant 0 : i32
    return %arg0, %arg1 : i32, i32
  }
}

module attributes {stable_mosaic.version = 11 : i64} {
  func.func @_gemm_kernel(%arg0: i32, %arg1: i32, %arg2: i32, %arg3: i32, %arg4: memref<1x8x128xbf16, #tpu.memory_space<vmem>>, %arg5: memref<128x128xbf16, #tpu.memory_space<vmem>>, %arg6: memref<1x128xf32, #tpu.memory_space<vmem>>, %arg7: memref<8x128xf32, #tpu.memory_space<vmem>>, %arg8: memref<8x128xf32, #tpu.memory_space<vmem>>) attributes {dimension_semantics = [#tpu.dimension_semantics<parallel>, #tpu.dimension_semantics<parallel>, #tpu.dimension_semantics<arbitrary>, #tpu.dimension_semantics<arbitrary>], iteration_bounds = array<i64: 1, 1, 1, 1>, scalar_prefetch = 0 : i64, scratch_operands = 1 : i64, tpu.core_type = #tpu.core_type<tc>, window_params = [{transform_indices = @transform_0, window_bounds = array<i64: 1, 8, 128>}, {transform_indices = @transform_1, window_bounds = array<i64: 128, 128>}, {transform_indices = @transform_2, window_bounds = array<i64: 1, 128>}, {transform_indices = @transform_3, window_bounds = array<i64: 8, 128>}]} {
    %c0_i32 = arith.constant 0 : i32
    %0 = arith.cmpi eq, %arg3, %c0_i32 : i32
    %1 = arith.extui %0 : i1 to i32
    %c0_i32_0 = arith.constant 0 : i32
    %2 = arith.cmpi ne, %1, %c0_i32_0 : i32
    scf.if %2 {
      %cst_11 = arith.constant 0.000000e+00 : f32
      %13 = vector.broadcast %cst_11 : f32 to vector<8x128xf32>
      %c0_12 = arith.constant 0 : index
      %c0_13 = arith.constant 0 : index
      %14 = vector.load %arg8[%c0_12, %c0_13] : memref<8x128xf32, #tpu.memory_space<vmem>>, vector<8x128xf32>
      tpu.vector_store %arg8[%c0_12, %c0_13], %13 {strides = array<i32>} : memref<8x128xf32, #tpu.memory_space<vmem>>, vector<8x128xf32>,
    } else {
    }
    %c0 = arith.constant 0 : index
    %c0_1 = arith.constant 0 : index
    %3 = vector.load %arg8[%c0, %c0_1] : memref<8x128xf32, #tpu.memory_space<vmem>>, vector<8x128xf32>
    %c0_2 = arith.constant 0 : index
    %c0_3 = arith.constant 0 : index
    %c0_4 = arith.constant 0 : index
    %4 = vector.load %arg4[%c0_2, %c0_3, %c0_4] : memref<1x8x128xbf16, #tpu.memory_space<vmem>>, vector<1x8x128xbf16>
    %5 = vector.shape_cast %4 : vector<1x8x128xbf16> to vector<8x128xbf16>
    %c0_5 = arith.constant 0 : index
    %c0_6 = arith.constant 0 : index
    %6 = vector.load %arg5[%c0_5, %c0_6] : memref<128x128xbf16, #tpu.memory_space<vmem>>, vector<128x128xbf16>
    %cst = arith.constant dense<0.000000e+00> : vector<8x128xf32>
    %7 = tpu.matmul %5, %6, %cst {dimension_numbers = #tpu.dot_dimension_numbers<[1], [0], [0], [1], [0, 0, 1, 1], [], []>} : vector<8x128xbf16>, vector<128x128xbf16>, vector<8x128xf32> -> vector<8x128xf32>
    %8 = arith.addf %3, %7 : vector<8x128xf32>
    %c0_7 = arith.constant 0 : index
    %c0_8 = arith.constant 0 : index
    %9 = vector.load %arg8[%c0_7, %c0_8] : memref<8x128xf32, #tpu.memory_space<vmem>>, vector<8x128xf32>
    tpu.vector_store %arg8[%c0_7, %c0_8], %8 {strides = array<i32>} : memref<8x128xf32, #tpu.memory_space<vmem>>, vector<8x128xf32>,
    %c0_i32_9 = arith.constant 0 : i32
    %10 = arith.cmpi eq, %arg3, %c0_i32_9 : i32
    %11 = arith.extui %10 : i1 to i32
    %c0_i32_10 = arith.constant 0 : i32
    %12 = arith.cmpi ne, %11, %c0_i32_10 : i32
    scf.if %12 {
      %c0_11 = arith.constant 0 : index
      %c0_12 = arith.constant 0 : index
      %13 = vector.load %arg8[%c0_11, %c0_12] : memref<8x128xf32, #tpu.memory_space<vmem>>, vector<8x128xf32>
      %c0_13 = arith.constant 0 : index
      %c0_14 = arith.constant 0 : index
      %14 = vector.load %arg6[%c0_13, %c0_14] : memref<1x128xf32, #tpu.memory_space<vmem>>, vector<1x128xf32>
      %15 = vector.broadcast %14 : vector<1x128xf32> to vector<8x128xf32>
      %16 = arith.addf %13, %15 : vector<8x128xf32>
      %c0_i32_15 = arith.constant 0 : i32
      %17 = arith.cmpi eq, %arg2, %c0_i32_15 : i32
      %18 = arith.extui %17 : i1 to i32
      %c0_i32_16 = arith.constant 0 : i32
      %19 = arith.cmpi ne, %18, %c0_i32_16 : i32
      scf.if %19 {
        %c0_19 = arith.constant 0 : index
        %c0_20 = arith.constant 0 : index
        %23 = vector.load %arg7[%c0_19, %c0_20] : memref<8x128xf32, #tpu.memory_space<vmem>>, vector<8x128xf32>
        tpu.vector_store %arg7[%c0_19, %c0_20], %16 {strides = array<i32>} : memref<8x128xf32, #tpu.memory_space<vmem>>, vector<8x128xf32>,
      } else {
      }
      %c0_i32_17 = arith.constant 0 : i32
      %20 = arith.cmpi sgt, %arg2, %c0_i32_17 : i32
      %21 = arith.extui %20 : i1 to i32
      %c0_i32_18 = arith.constant 0 : i32
      %22 = arith.cmpi ne, %21, %c0_i32_18 : i32
      scf.if %22 {
        %c0_19 = arith.constant 0 : index
        %c0_20 = arith.constant 0 : index
        %23 = vector.load %arg7[%c0_19, %c0_20] : memref<8x128xf32, #tpu.memory_space<vmem>>, vector<8x128xf32>
        %24 = arith.maximumf %23, %16 : vector<8x128xf32>
        %c0_21 = arith.constant 0 : index
        %c0_22 = arith.constant 0 : index
        %25 = vector.load %arg7[%c0_21, %c0_22] : memref<8x128xf32, #tpu.memory_space<vmem>>, vector<8x128xf32>
        tpu.vector_store %arg7[%c0_21, %c0_22], %24 {strides = array<i32>} : memref<8x128xf32, #tpu.memory_space<vmem>>, vector<8x128xf32>,
      } else {
      }
    } else {
    }
    return
  }
  func.func @transform_0(%arg0: i32, %arg1: i32, %arg2: i32, %arg3: i32) -> (i32, i32, i32) {
    %c0_i32 = arith.constant 0 : i32
    return %arg2, %arg0, %arg3 : i32, i32, i32
  }
  func.func @transform_1(%arg0: i32, %arg1: i32, %arg2: i32, %arg3: i32) -> (i32, i32) {
    %c0_i32 = arith.constant 0 : i32
    return %arg3, %arg1 : i32, i32
  }
  func.func @transform_2(%arg0: i32, %arg1: i32, %arg2: i32, %arg3: i32) -> (i32, i32) {
    %c0_i32 = arith.constant 0 : i32
    %c0_i32_0 = arith.constant 0 : i32
    return %c0_i32, %arg1 : i32, i32
  }
  func.func @transform_3(%arg0: i32, %arg1: i32, %arg2: i32, %arg3: i32) -> (i32, i32) {
    %c0_i32 = arith.constant 0 : i32
    return %arg0, %arg1 : i32, i32
  }
}

</mosaic_0001>

<llo_original>
// kernel: cnn_forward.4
$region0: #{cnn_forward.4}
  #allocation0 [shape = 'u32[]', space=smem, size = 0x4, offset = 0x4, fixed_abs, tag = 'smem constant byte address 0x4 - core index']
  #allocation1 [shape = 'u32[72,128]{1,0:T(1,128)}', space=vmem, size = 0x9000, scoped, tag = 'internal scratch']
  #allocation2 [shape = 'f32[128,128]{1,0:T(8,128)}', space=vmem, size = 0x10000, scoped, tag = 'scratch operand']
  %s0 = inlined_call_operand.vmem [shape: bf16[1,1408,128], index: 0, kind: input, shape index: {}]
  %s1 = inlined_call_operand.vmem [shape: bf16[128,128], index: 1, kind: input, shape index: {}]
  %s2 = inlined_call_operand.vmem [shape: f32[1,128], index: 2, kind: input, shape index: {}]
  %s3 = inlined_call_operand.vmem [shape: bf16[1408,128], index: 3, kind: output, shape index: {}]
  %s4 = sld [smem:[#allocation0]]
  $region61: #{cnn_forward.4} parent=0
    _
  %s6 = ssub.s32 1, %s4
  %s7 = scalar_select 0, %s6, %s4
  loop: start=0, step=1, limit=13
  $region2: #{cnn_forward.4} parent=0 // loop_pre_header
    _
  $region3: #{cnn_forward.4} parent=0 // loop_header
    %s9 = sphi 0, %s13
    %p10 = scmp.ge.s32.totalorder %s9, 13
    %s16 = sphi 0, %s42
    %s17 = sphi 0, %s38
    %s18 = sphi 0, %s34
    %s19 = sphi 0, %s30
    %s20 = sphi 0, %s16
    %s21 = sphi 0, %s17
    %s22 = sphi 0, %s18
    %s23 = sphi 0, %s19
    %s24 = sphi 0, %s20
    %s25 = sphi 0, %s21
    %s26 = sphi 0, %s22
    %s27 = sphi 0, %s23
    %s49 = sphi 0, %s51
    %s52 = sphi 0, %s49
    %s53 = sphi 0, %s52
    %s69 = sphi 0, %s53
    %s77 = sphi 0, %s79
    %s80 = sphi 0, %s77
    %s81 = sphi 0, %s80
    %s97 = sphi 0, %s81
    %s103 = sphi 0, %s105
    %s106 = sphi 0, %s103
    %s107 = sphi 0, %s106
    %s123 = sphi 0, %s107
    %s131 = sphi 0, %s133
    %s134 = sphi 0, %s131
    %s135 = sphi 0, %s134
    %s151 = sphi 0, %s135
  $region4: #{cnn_forward.4} parent=0 // loop_header_branch
    %12 = sbr.rel (%p10) target = $region8
  $region5: #{cnn_forward.4} parent=0 // loop_body
    %s14 = ssub.s32 %s9, 1
    %s15 = ssub.s32 %s9, 2
    %s28 = sadd.s32 1, %s19
    %p29 = scmp.ge.s32.totalorder %s28, 1
    %s30 = scalar_select %p29, 0, %s28
    %s31 = sadd.s32 1, %s18
    %s32 = scalar_select %p29, %s31, %s18
    %p33 = scmp.ge.s32.totalorder %s32, 1
    %s34 = scalar_select %p33, 0, %s32
    %s35 = sadd.s32 1, %s17
    %s36 = scalar_select %p33, %s35, %s17
    %p37 = scmp.ge.s32.totalorder %s36, 1
    %s38 = scalar_select %p37, 0, %s36
    %s39 = sadd.s32 1, %s16
    %s40 = scalar_select %p37, %s39, %s16
    %p41 = scmp.ge.s32.totalorder %s40, 11
    %s42 = scalar_select %p41, 0, %s40
    %s43 = ssub.s32 %s18, %s34
    %s44 = ssub.s32 %s16, %s42
    %s45 = sor.u32 %s43, %s44
    %s46 = ssub.s32 %s19, %s30
    %s47 = sor.u32 %s45, %s46
    %p48 = scmp.eq.s32.totalorder %s47, 0
    %s50 = sadd.s32 %s49, 1
    %s51 = scalar_select %p48, %s49, %s50
    %p54 = pneg %p48
    %p55 = scmp.eq.s32.totalorder %s9, 10
    %p56 = por %p54, %p55
    %p57 = scmp.ne.s32.totalorder %s49, %s52
    %p58 = scmp.eq.s32.totalorder %s9, 0
    %p59 = por %p57, %p58
    %p60 = scmp.ne.s32.totalorder %s49, %s52
    %p61 = scmp.eq.s32.totalorder %s14, 10
    %p62 = por %p60, %p61
    %p63 = scmp.ne.s32.totalorder %s52, %s53
    %p64 = scmp.eq.s32.totalorder %s14, 0
    %p65 = por %p63, %p64
    %p66 = scmp.ne.s32.totalorder %s52, %s53
    %p67 = scmp.eq.s32.totalorder %s15, 10
    %p68 = por %p66, %p67
    %p70 = scmp.ne.s32.totalorder %s53, %s69
    %p71 = scmp.eq.s32.totalorder %s15, 0
    %p72 = por %p70, %p71
    %s73 = ssub.s32 %s19, %s30
    %s74 = ssub.s32 %s17, %s38
    %s75 = sor.u32 %s73, %s74
    %p76 = scmp.eq.s32.totalorder %s75, 0
    %s78 = sadd.s32 %s77, 1
    %s79 = scalar_select %p76, %s77, %s78
    %p82 = pneg %p76
    %p83 = scmp.eq.s32.totalorder %s9, 10
    %p84 = por %p82, %p83
    %p85 = scmp.ne.s32.totalorder %s77, %s80
    %p86 = scmp.eq.s32.totalorder %s9, 0
    %p87 = por %p85, %p86
    %p88 = scmp.ne.s32.totalorder %s77, %s80
    %p89 = scmp.eq.s32.totalorder %s14, 10
    %p90 = por %p88, %p89
    %p91 = scmp.ne.s32.totalorder %s80, %s81
    %p92 = scmp.eq.s32.totalorder %s14, 0
    %p93 = por %p91, %p92
    %p94 = scmp.ne.s32.totalorder %s80, %s81
    %p95 = scmp.eq.s32.totalorder %s15, 10
    %p96 = por %p94, %p95
    %p98 = scmp.ne.s32.totalorder %s81, %s97
    %p99 = scmp.eq.s32.totalorder %s15, 0
    %p100 = por %p98, %p99
    %s101 = ssub.s32 %s17, %s38
    %p102 = scmp.eq.s32.totalorder %s101, 0
    %s104 = sadd.s32 %s103, 1
    %s105 = scalar_select %p102, %s103, %s104
    %p108 = pneg %p102
    %p109 = scmp.eq.s32.totalorder %s9, 10
    %p110 = por %p108, %p109
    %p111 = scmp.ne.s32.totalorder %s103, %s106
    %p112 = scmp.eq.s32.totalorder %s9, 0
    %p113 = por %p111, %p112
    %p114 = scmp.ne.s32.totalorder %s103, %s106
    %p115 = scmp.eq.s32.totalorder %s14, 10
    %p116 = por %p114, %p115
    %p117 = scmp.ne.s32.totalorder %s106, %s107
    %p118 = scmp.eq.s32.totalorder %s14, 0
    %p119 = por %p117, %p118
    %p120 = scmp.ne.s32.totalorder %s106, %s107
    %p121 = scmp.eq.s32.totalorder %s15, 10
    %p122 = por %p120, %p121
    %p124 = scmp.ne.s32.totalorder %s107, %s123
    %p125 = scmp.eq.s32.totalorder %s15, 0
    %p126 = por %p124, %p125
    %s127 = ssub.s32 %s16, %s42
    %s128 = ssub.s32 %s17, %s38
    %s129 = sor.u32 %s127, %s128
    %p130 = scmp.eq.s32.totalorder %s129, 0
    %s132 = sadd.s32 %s131, 1
    %s133 = scalar_select %p130, %s131, %s132
    %p136 = pneg %p130
    %p137 = scmp.eq.s32.totalorder %s9, 10
    %p138 = por %p136, %p137
    %p139 = scmp.ne.s32.totalorder %s131, %s134
    %p140 = scmp.eq.s32.totalorder %s9, 0
    %p141 = por %p139, %p140
    %p142 = scmp.ne.s32.totalorder %s131, %s134
    %p143 = scmp.eq.s32.totalorder %s14, 10
    %p144 = por %p142, %p143
    %p145 = scmp.ne.s32.totalorder %s134, %s135
    %p146 = scmp.eq.s32.totalorder %s14, 0
    %p147 = por %p145, %p146
    %p148 = scmp.ne.s32.totalorder %s134, %s135
    %p149 = scmp.eq.s32.totalorder %s15, 10
    %p150 = por %p148, %p149
    %p152 = scmp.ne.s32.totalorder %s135, %s151
    %p153 = scmp.eq.s32.totalorder %s15, 0
    %p154 = por %p152, %p153
    %p155 = scmp.le.s32.totalorder 1, %s9
    %p156 = scmp.lt.s32.totalorder %s9, 12
    %p157 = pnand %p155, %p156
    %p158 = pneg %p157
    // Predicated region
    $region9: #{cnn_forward.4} parent=5 // pred_check
      _
    $region10: #{cnn_forward.4} parent=5 // pred_check_branch
      %160 = sbr.rel (%p157) target = $region12
    $region11: #{cnn_forward.4} parent=5 // pred_region
      %s161 = ssub.s32 %s9, 1
      // Predicated region
      $region13: #{cnn_forward.4} parent=11 // pred_check
        %p162 = pneg %p93
      $region14: #{cnn_forward.4} parent=11 // pred_check_branch
        %164 = sbr.rel (%p162) target = $region16
      $region15: #{cnn_forward.4} parent=11 // pred_region
        %s165 = smul.u32 16, %s23
        %p166 = scmp.lt.s32.totalorder %s165, 15
        %s167 = scalar_select %p166, %s165, 15
        %p168 = scmp.lt.s32.totalorder %s21, 0
        %s169 = scalar_select %p168, %s21, 0
        %s170 = sadd.s32 %s169, %s167
        %s171 = smul.addr %s170, 4
        %s172 = scalar_lea.vmem %s1, %s171
        %s173 = smul.u32 16, %s23
      $region16: #{cnn_forward.4} parent=11 // pred_fallthru
        _
      // Predicated region
      $region17: #{cnn_forward.4} parent=11 // pred_check
        %p174 = pneg %p119
      $region18: #{cnn_forward.4} parent=11 // pred_check_branch
        %176 = sbr.rel (%p174) target = $region20
      $region19: #{cnn_forward.4} parent=11 // pred_region
        %p177 = scmp.lt.s32.totalorder %s21, 0
        %s178 = scalar_select %p177, %s21, 0
        %s179 = scalar_lea.vmem %s2, %s178
      $region20: #{cnn_forward.4} parent=11 // pred_fallthru
        _
    $region12: #{cnn_forward.4} parent=5 // pred_fallthru
      _
    %p180 = scmp.lt.s32.totalorder %s9, 11
    // Predicated region
    $region21: #{cnn_forward.4} parent=5 // pred_check
      %p181 = pneg %p180
    $region22: #{cnn_forward.4} parent=5 // pred_check_branch
      %183 = sbr.rel (%p181) target = $region24
    $region23: #{cnn_forward.4} parent=5 // pred_region
      // Predicated region
      $region25: #{cnn_forward.4} parent=23 // pred_check
        %p184 = pneg %p59
      $region26: #{cnn_forward.4} parent=23 // pred_check_branch
        %186 = sbr.rel (%p184) target = $region28
      $region27: #{cnn_forward.4} parent=23 // pred_region
        %s187 = smul.u32 16, %s16
        %p188 = scmp.lt.s32.totalorder %s18, 0
        %s189 = scalar_select %p188, %s18, 0
        %p190 = scmp.lt.s32.totalorder %s187, 175
        %s191 = scalar_select %p190, %s187, 175
        %p192 = scmp.lt.s32.totalorder %s19, 0
        %s193 = scalar_select %p192, %s19, 0
        %s194 = sadd.s32 %s193, %s191
        %s195 = smul.addr %s189, 176
        %s196 = sadd.s32 %s194, %s195
        %s197 = smul.addr %s196, 4
        %s198 = scalar_lea.vmem %s0, %s197
        %s199 = smul.u32 16, %s16
      $region28: #{cnn_forward.4} parent=23 // pred_fallthru
        _
    $region24: #{cnn_forward.4} parent=5 // pred_fallthru
      _
    %p200 = scmp.le.s32.totalorder 1, %s9
    %p201 = scmp.lt.s32.totalorder %s9, 12
    %p202 = pnand %p200, %p201
    %p203 = pneg %p202
    // Predicated region
    $region29: #{cnn_forward.4} parent=5 // pred_check
      _
    $region30: #{cnn_forward.4} parent=5 // pred_check_branch
      %205 = sbr.rel (%p202) target = $region32
    $region31: #{cnn_forward.4} parent=5 // pred_region
      %s206 = ssub.s32 %s9, 1
      %s207 = smul.u32 16, %s20
      %p208 = scmp.lt.s32.totalorder %s22, 0
      %s209 = scalar_select %p208, %s22, 0
      %p210 = scmp.lt.s32.totalorder %s207, 175
      %s211 = scalar_select %p210, %s207, 175
      %p212 = scmp.lt.s32.totalorder %s23, 0
      %s213 = scalar_select %p212, %s23, 0
      %s214 = sadd.s32 %s213, %s211
      %s215 = smul.addr %s209, 176
      %s216 = sadd.s32 %s214, %s215
      %s217 = smul.addr %s216, 4
      %s218 = scalar_lea.vmem %s0, %s217
      %p219 = pneg %p65
      %p220 = pneg %p62
      %s221 = smul.u32 16, %s23
      %p222 = scmp.lt.s32.totalorder %s221, 15
      %s223 = scalar_select %p222, %s221, 15
      %p224 = scmp.lt.s32.totalorder %s21, 0
      %s225 = scalar_select %p224, %s21, 0
      %s226 = sadd.s32 %s225, %s223
      %s227 = smul.addr %s226, 4
      %s228 = scalar_lea.vmem %s1, %s227
      %p229 = pneg %p93
      %p230 = pneg %p90
      %p231 = scmp.lt.s32.totalorder %s21, 0
      %s232 = scalar_select %p231, %s21, 0
      %s233 = scalar_lea.vmem %s2, %s232
      %p234 = pneg %p119
      %p235 = pneg %p116
      %p236 = pneg %p147
      %p237 = pneg %p144
      %s238 = smul.u32 16, %s20
      %p239 = scmp.lt.s32.totalorder %s238, 175
      %s240 = scalar_select %p239, %s238, 175
      %p241 = scmp.lt.s32.totalorder %s21, 0
      %s242 = scalar_select %p241, %s21, 0
      %s243 = sadd.s32 %s242, %s240
      %s244 = smul.addr %s243, 4
      %s245 = scalar_lea.vmem %s3, %s244
      %s246 = smul.u32 16, %s20
      %p247 = scmp.lt.s32.totalorder %s22, 0
      %s248 = scalar_select %p247, %s22, 0
      %p249 = scmp.lt.s32.totalorder %s246, 175
      %s250 = scalar_select %p249, %s246, 175
      %p251 = scmp.lt.s32.totalorder %s23, 0
      %s252 = scalar_select %p251, %s23, 0
      %s253 = sadd.s32 %s252, %s250
      %s254 = smul.addr %s248, 176
      %s255 = sadd.s32 %s253, %s254
      %s256 = smul.addr %s255, 4
      %s257 = scalar_lea.vmem %s0, %s256
      %s258 = smul.u32 16, %s20
      %s259 = smul.u32 16, %s23
      %p260 = scmp.lt.s32.totalorder %s259, 15
      %s261 = scalar_select %p260, %s259, 15
      %p262 = scmp.lt.s32.totalorder %s21, 0
      %s263 = scalar_select %p262, %s21, 0
      %s264 = sadd.s32 %s263, %s261
      %s265 = smul.addr %s264, 4
      %s266 = scalar_lea.vmem %s1, %s265
      %s267 = smul.u32 16, %s23
      %p268 = scmp.lt.s32.totalorder %s21, 0
      %s269 = scalar_select %p268, %s21, 0
      %s270 = scalar_lea.vmem %s2, %s269
      %s271 = smul.u32 16, %s20
      %p272 = scmp.lt.s32.totalorder %s271, 175
      %s273 = scalar_select %p272, %s271, 175
      %p274 = scmp.lt.s32.totalorder %s21, 0
      %s275 = scalar_select %p274, %s21, 0
      %s276 = sadd.s32 %s275, %s273
      %s277 = smul.addr %s276, 4
      %s278 = scalar_lea.vmem %s3, %s277
      %s279 = smul.u32 16, %s20
      %p280 = scmp.eq.s32.totalorder %s23, 0
      // Predicated region
      $region33: #{cnn_forward.4} parent=31 // pred_check
        %p281 = pneg %p280
      $region34: #{cnn_forward.4} parent=31 // pred_check_branch
        %283 = sbr.rel (%p281) target = $region36
      $region35: #{cnn_forward.4} parent=31 // pred_region
        %284 = vst [vmem:[#allocation2] sm:$0xff] 0.0
        %285 = vst [vmem:[#allocation2 + $0x8] sm:$0xff] 0.0
        %286 = vst [vmem:[#allocation2 + $0x10] sm:$0xff] 0.0
        %287 = vst [vmem:[#allocation2 + $0x18] sm:$0xff] 0.0
        %288 = vst [vmem:[#allocation2 + $0x20] sm:$0xff] 0.0
        %289 = vst [vmem:[#allocation2 + $0x28] sm:$0xff] 0.0
        %290 = vst [vmem:[#allocation2 + $0x30] sm:$0xff] 0.0
        %291 = vst [vmem:[#allocation2 + $0x38] sm:$0xff] 0.0
        %292 = vst [vmem:[#allocation2 + $0x40] sm:$0xff] 0.0
        %293 = vst [vmem:[#allocation2 + $0x48] sm:$0xff] 0.0
        %294 = vst [vmem:[#allocation2 + $0x50] sm:$0xff] 0.0
        %295 = vst [vmem:[#allocation2 + $0x58] sm:$0xff] 0.0
        %296 = vst [vmem:[#allocation2 + $0x60] sm:$0xff] 0.0
        %297 = vst [vmem:[#allocation2 + $0x68] sm:$0xff] 0.0
        %298 = vst [vmem:[#allocation2 + $0x70] sm:$0xff] 0.0
        %299 = vst [vmem:[#allocation2 + $0x78] sm:$0xff] 0.0
      $region36: #{cnn_forward.4} parent=31 // pred_fallthru
        _
      %v300 = vld [vmem:[#allocation2] sm:$0xff]
      %v301 = vld [vmem:[#allocation2 + $0x8] sm:$0xff]
      %v302 = vld [vmem:[#allocation2 + $0x10] sm:$0xff]
      %v303 = vld [vmem:[#allocation2 + $0x18] sm:$0xff]
      %v304 = vld [vmem:[#allocation2 + $0x20] sm:$0xff]
      %v305 = vld [vmem:[#allocation2 + $0x28] sm:$0xff]
      %v306 = vld [vmem:[#allocation2 + $0x30] sm:$0xff]
      %v307 = vld [vmem:[#allocation2 + $0x38] sm:$0xff]
      %v308 = vld [vmem:[#allocation2 + $0x40] sm:$0xff]
      %v309 = vld [vmem:[#allocation2 + $0x48] sm:$0xff]
      %v310 = vld [vmem:[#allocation2 + $0x50] sm:$0xff]
      %v311 = vld [vmem:[#allocation2 + $0x58] sm:$0xff]
      %v312 = vld [vmem:[#allocation2 + $0x60] sm:$0xff]
      %v313 = vld [vmem:[#allocation2 + $0x68] sm:$0xff]
      %v314 = vld [vmem:[#allocation2 + $0x70] sm:$0xff]
      %v315 = vld [vmem:[#allocation2 + $0x78] sm:$0xff]
      %v316 = vld [vmem:[%s257] sm:$0xf]
      %v317 = vld [vmem:[%s257 + $0x4] sm:$0xf]
      %v318 = vld [vmem:[%s257 + $0x8] sm:$0xf]
      %v319 = vld [vmem:[%s257 + $0xc] sm:$0xf]
      %v320 = vld [vmem:[%s257 + $0x10] sm:$0xf]
      %v321 = vld [vmem:[%s257 + $0x14] sm:$0xf]
      %v322 = vld [vmem:[%s257 + $0x18] sm:$0xf]
      %v323 = vld [vmem:[%s257 + $0x1c] sm:$0xf]
      %v324 = vld [vmem:[%s257 + $0x20] sm:$0xf]
      %v325 = vld [vmem:[%s257 + $0x24] sm:$0xf]
      %v326 = vld [vmem:[%s257 + $0x28] sm:$0xf]
      %v327 = vld [vmem:[%s257 + $0x2c] sm:$0xf]
      %v328 = vld [vmem:[%s257 + $0x30] sm:$0xf]
      %v329 = vld [vmem:[%s257 + $0x34] sm:$0xf]
      %v330 = vld [vmem:[%s257 + $0x38] sm:$0xf]
      %v331 = vld [vmem:[%s257 + $0x3c] sm:$0xf]
      %v332 = vld [vmem:[%s266] sm:$0xf]
      %v333 = vld [vmem:[%s266 + $0x4] sm:$0xf]
      %v334 = vld [vmem:[%s266 + $0x8] sm:$0xf]
      %v335 = vld [vmem:[%s266 + $0xc] sm:$0xf]
      %v336 = vld [vmem:[%s266 + $0x10] sm:$0xf]
      %v337 = vld [vmem:[%s266 + $0x14] sm:$0xf]
      %v338 = vld [vmem:[%s266 + $0x18] sm:$0xf]
      %v339 = vld [vmem:[%s266 + $0x1c] sm:$0xf]
      %v340 = vld [vmem:[%s266 + $0x20] sm:$0xf]
      %v341 = vld [vmem:[%s266 + $0x24] sm:$0xf]
      %v342 = vld [vmem:[%s266 + $0x28] sm:$0xf]
      %v343 = vld [vmem:[%s266 + $0x2c] sm:$0xf]
      %v344 = vld [vmem:[%s266 + $0x30] sm:$0xf]
      %v345 = vld [vmem:[%s266 + $0x34] sm:$0xf]
      %v346 = vld [vmem:[%s266 + $0x38] sm:$0xf]
      %v347 = vld [vmem:[%s266 + $0x3c] sm:$0xf]
      %v364 = vunpack.c.l.b16 %v316
      %v365 = vunpack.c.l.b16 %v317
      %v366 = vunpack.c.l.b16 %v318
      %v367 = vunpack.c.l.b16 %v319
      %v368 = vunpack.c.l.b16 %v320
      %v369 = vunpack.c.l.b16 %v321
      %v370 = vunpack.c.l.b16 %v322
      %v371 = vunpack.c.l.b16 %v323
      %v372 = vunpack.c.l.b16 %v324
      %v373 = vunpack.c.l.b16 %v325
      %v374 = vunpack.c.l.b16 %v326
      %v375 = vunpack.c.l.b16 %v327
      %v376 = vunpack.c.l.b16 %v328
      %v377 = vunpack.c.l.b16 %v329
      %v378 = vunpack.c.l.b16 %v330
      %v379 = vunpack.c.l.b16 %v331
      %v380 = vpack.c.b16 %v365, %v364
      %v381 = vpack.c.b16 %v367, %v366
      %v382 = vpack.c.b16 %v369, %v368
      %v383 = vpack.c.b16 %v371, %v370
      %v384 = vpack.c.b16 %v373, %v372
      %v385 = vpack.c.b16 %v375, %v374
      %v386 = vpack.c.b16 %v377, %v376
      %v387 = vpack.c.b16 %v379, %v378
      %v412 = vunpack.c.l.b16 %v332
      %v413 = vunpack.c.l.b16 %v333
      %v414 = vunpack.c.l.b16 %v334
      %v415 = vunpack.c.l.b16 %v335
      %v416 = vunpack.c.l.b16 %v336
      %v417 = vunpack.c.l.b16 %v337
      %v418 = vunpack.c.l.b16 %v338
      %v419 = vunpack.c.l.b16 %v339
      %v420 = vunpack.c.l.b16 %v340
      %v421 = vunpack.c.l.b16 %v341
      %v422 = vunpack.c.l.b16 %v342
      %v423 = vunpack.c.l.b16 %v343
      %v424 = vunpack.c.l.b16 %v344
      %v425 = vunpack.c.l.b16 %v345
      %v426 = vunpack.c.l.b16 %v346
      %v427 = vunpack.c.l.b16 %v347
      %v428 = vpack.c.b16 %v413, %v412
      %v429 = vpack.c.b16 %v415, %v414
      %v430 = vpack.c.b16 %v417, %v416
      %v431 = vpack.c.b16 %v419, %v418
      %v432 = vpack.c.b16 %v421, %v420
      %v433 = vpack.c.b16 %v423, %v422
      %v434 = vpack.c.b16 %v425, %v424
      %v435 = vpack.c.b16 %v427, %v426
      %444 = vmatpush.bf16.msra.mxu0 %v435
      %445 = vmatpush.bf16.msra.mxu0 %v434
      %446 = vmatpush.bf16.msra.mxu0 %v433
      %447 = vmatpush.bf16.msra.mxu0 %v432
      %448 = vmatpush.bf16.msra.mxu0 %v431
      %449 = vmatpush.bf16.msra.mxu0 %v430
      %450 = vmatpush.bf16.msra.mxu0 %v429
      %451 = vmatpush.bf16.msra.mxu0 %v428
      %452 = vmatmul.bf16.gmra.mxu0 %v380
      %v453 = vpop.f32.mrf.mxu0
      %v454 = vadd.f32 0.0, %v453
      %v455 = vpop.f32.mrf.mxu0
      %v456 = vadd.f32 0.0, %v455
      %457 = vmatmul.bf16.gmra.mxu0 %v381
      %v458 = vpop.f32.mrf.mxu0
      %v459 = vadd.f32 0.0, %v458
      %v460 = vpop.f32.mrf.mxu0
      %v461 = vadd.f32 0.0, %v460
      %462 = vmatmul.bf16.gmra.mxu0 %v382
      %v463 = vpop.f32.mrf.mxu0
      %v464 = vadd.f32 0.0, %v463
      %v465 = vpop.f32.mrf.mxu0
      %v466 = vadd.f32 0.0, %v465
      %467 = vmatmul.bf16.gmra.mxu0 %v383
      %v468 = vpop.f32.mrf.mxu0
      %v469 = vadd.f32 0.0, %v468
      %v470 = vpop.f32.mrf.mxu0
      %v471 = vadd.f32 0.0, %v470
      %472 = vmatmul.bf16.gmra.mxu0 %v384
      %v473 = vpop.f32.mrf.mxu0
      %v474 = vadd.f32 0.0, %v473
      %v475 = vpop.f32.mrf.mxu0
      %v476 = vadd.f32 0.0, %v475
      %477 = vmatmul.bf16.gmra.mxu0 %v385
      %v478 = vpop.f32.mrf.mxu0
      %v479 = vadd.f32 0.0, %v478
      %v480 = vpop.f32.mrf.mxu0
      %v481 = vadd.f32 0.0, %v480
      %482 = vmatmul.bf16.gmra.mxu0 %v386
      %v483 = vpop.f32.mrf.mxu0
      %v484 = vadd.f32 0.0, %v483
      %v485 = vpop.f32.mrf.mxu0
      %v486 = vadd.f32 0.0, %v485
      %487 = vmatmul.bf16.gmra.mxu0 %v387
      %v488 = vpop.f32.mrf.mxu0
      %v489 = vadd.f32 0.0, %v488
      %v490 = vpop.f32.mrf.mxu0
      %v491 = vadd.f32 0.0, %v490
      %492 = vdwg.mxu0
      %v493 = vadd.f32 %v300, %v454
      %v494 = vadd.f32 %v301, %v456
      %v495 = vadd.f32 %v302, %v459
      %v496 = vadd.f32 %v303, %v461
      %v497 = vadd.f32 %v304, %v464
      %v498 = vadd.f32 %v305, %v466
      %v499 = vadd.f32 %v306, %v469
      %v500 = vadd.f32 %v307, %v471
      %v501 = vadd.f32 %v308, %v474
      %v502 = vadd.f32 %v309, %v476
      %v503 = vadd.f32 %v310, %v479
      %v504 = vadd.f32 %v311, %v481
      %v505 = vadd.f32 %v312, %v484
      %v506 = vadd.f32 %v313, %v486
      %v507 = vadd.f32 %v314, %v489
      %v508 = vadd.f32 %v315, %v491
      %509 = vst [vmem:[#allocation2] sm:$0xff] %v493
      %510 = vst [vmem:[#allocation2 + $0x8] sm:$0xff] %v494
      %511 = vst [vmem:[#allocation2 + $0x10] sm:$0xff] %v495
      %512 = vst [vmem:[#allocation2 + $0x18] sm:$0xff] %v496
      %513 = vst [vmem:[#allocation2 + $0x20] sm:$0xff] %v497
      %514 = vst [vmem:[#allocation2 + $0x28] sm:$0xff] %v498
      %515 = vst [vmem:[#allocation2 + $0x30] sm:$0xff] %v499
      %516 = vst [vmem:[#allocation2 + $0x38] sm:$0xff] %v500
      %517 = vst [vmem:[#allocation2 + $0x40] sm:$0xff] %v501
      %518 = vst [vmem:[#allocation2 + $0x48] sm:$0xff] %v502
      %519 = vst [vmem:[#allocation2 + $0x50] sm:$0xff] %v503
      %520 = vst [vmem:[#allocation2 + $0x58] sm:$0xff] %v504
      %521 = vst [vmem:[#allocation2 + $0x60] sm:$0xff] %v505
      %522 = vst [vmem:[#allocation2 + $0x68] sm:$0xff] %v506
      %523 = vst [vmem:[#allocation2 + $0x70] sm:$0xff] %v507
      %524 = vst [vmem:[#allocation2 + $0x78] sm:$0xff] %v508
      // Predicated region
      $region37: #{cnn_forward.4} parent=31 // pred_check
        %p525 = pneg %p280
      $region38: #{cnn_forward.4} parent=31 // pred_check_branch
        %527 = sbr.rel (%p525) target = $region40
      $region39: #{cnn_forward.4} parent=31 // pred_region
        %v528 = vld [vmem:[#allocation2] sm:$0xff]
        %v529 = vld [vmem:[#allocation2 + $0x8] sm:$0xff]
        %v530 = vld [vmem:[#allocation2 + $0x10] sm:$0xff]
        %v531 = vld [vmem:[#allocation2 + $0x18] sm:$0xff]
        %v532 = vld [vmem:[#allocation2 + $0x20] sm:$0xff]
        %v533 = vld [vmem:[#allocation2 + $0x28] sm:$0xff]
        %v534 = vld [vmem:[#allocation2 + $0x30] sm:$0xff]
        %v535 = vld [vmem:[#allocation2 + $0x38] sm:$0xff]
        %v536 = vld [vmem:[#allocation2 + $0x40] sm:$0xff]
        %v537 = vld [vmem:[#allocation2 + $0x48] sm:$0xff]
        %v538 = vld [vmem:[#allocation2 + $0x50] sm:$0xff]
        %v539 = vld [vmem:[#allocation2 + $0x58] sm:$0xff]
        %v540 = vld [vmem:[#allocation2 + $0x60] sm:$0xff]
        %v541 = vld [vmem:[#allocation2 + $0x68] sm:$0xff]
        %v542 = vld [vmem:[#allocation2 + $0x70] sm:$0xff]
        %v543 = vld [vmem:[#allocation2 + $0x78] sm:$0xff]
        %v544 = vld [vmem:[%s270] sm:$0x1]
        %v546 = vperm.slane %v544, 0
        %v548 = vadd.f32 %v528, %v546
        %v549 = vadd.f32 %v529, %v546
        %v550 = vadd.f32 %v530, %v546
        %v551 = vadd.f32 %v531, %v546
        %v552 = vadd.f32 %v532, %v546
        %v553 = vadd.f32 %v533, %v546
        %v554 = vadd.f32 %v534, %v546
        %v555 = vadd.f32 %v535, %v546
        %v556 = vadd.f32 %v536, %v546
        %v557 = vadd.f32 %v537, %v546
        %v558 = vadd.f32 %v538, %v546
        %v559 = vadd.f32 %v539, %v546
        %v560 = vadd.f32 %v540, %v546
        %v561 = vadd.f32 %v541, %v546
        %v562 = vadd.f32 %v542, %v546
        %v563 = vadd.f32 %v543, %v546
        %v564 = vmax.f32 %v548, 0.0
        %v565 = vmax.f32 %v549, 0.0
        %v566 = vmax.f32 %v550, 0.0
        %v567 = vmax.f32 %v551, 0.0
        %v568 = vmax.f32 %v552, 0.0
        %v569 = vmax.f32 %v553, 0.0
        %v570 = vmax.f32 %v554, 0.0
        %v571 = vmax.f32 %v555, 0.0
        %v572 = vmax.f32 %v556, 0.0
        %v573 = vmax.f32 %v557, 0.0
        %v574 = vmax.f32 %v558, 0.0
        %v575 = vmax.f32 %v559, 0.0
        %v576 = vmax.f32 %v560, 0.0
        %v577 = vmax.f32 %v561, 0.0
        %v578 = vmax.f32 %v562, 0.0
        %v579 = vmax.f32 %v563, 0.0
        %v580 = vpack.c.bf16 %v564, %v564
        %v581 = vpack.c.bf16 %v565, %v565
        %v582 = vpack.c.bf16 %v566, %v566
        %v583 = vpack.c.bf16 %v567, %v567
        %v584 = vpack.c.bf16 %v568, %v568
        %v585 = vpack.c.bf16 %v569, %v569
        %v586 = vpack.c.bf16 %v570, %v570
        %v587 = vpack.c.bf16 %v571, %v571
        %v588 = vpack.c.bf16 %v572, %v572
        %v589 = vpack.c.bf16 %v573, %v573
        %v590 = vpack.c.bf16 %v574, %v574
        %v591 = vpack.c.bf16 %v575, %v575
        %v592 = vpack.c.bf16 %v576, %v576
        %v593 = vpack.c.bf16 %v577, %v577
        %v594 = vpack.c.bf16 %v578, %v578
        %v595 = vpack.c.bf16 %v579, %v579
        %p596 = scmp.eq.s32.totalorder %s22, 0
        // Predicated region
        $region41: #{cnn_forward.4} parent=39 // pred_check
          %p597 = pneg %p596
        $region42: #{cnn_forward.4} parent=39 // pred_check_branch
          %599 = sbr.rel (%p597) target = $region44
        $region43: #{cnn_forward.4} parent=39 // pred_region
          %600 = vst [vmem:[%s278] sm:$0xf] %v580
          %601 = vst [vmem:[%s278 + $0x4] sm:$0xf] %v581
          %602 = vst [vmem:[%s278 + $0x8] sm:$0xf] %v582
          %603 = vst [vmem:[%s278 + $0xc] sm:$0xf] %v583
          %604 = vst [vmem:[%s278 + $0x10] sm:$0xf] %v584
          %605 = vst [vmem:[%s278 + $0x14] sm:$0xf] %v585
          %606 = vst [vmem:[%s278 + $0x18] sm:$0xf] %v586
          %607 = vst [vmem:[%s278 + $0x1c] sm:$0xf] %v587
          %608 = vst [vmem:[%s278 + $0x20] sm:$0xf] %v588
          %609 = vst [vmem:[%s278 + $0x24] sm:$0xf] %v589
          %610 = vst [vmem:[%s278 + $0x28] sm:$0xf] %v590
          %611 = vst [vmem:[%s278 + $0x2c] sm:$0xf] %v591
          %612 = vst [vmem:[%s278 + $0x30] sm:$0xf] %v592
          %613 = vst [vmem:[%s278 + $0x34] sm:$0xf] %v593
          %614 = vst [vmem:[%s278 + $0x38] sm:$0xf] %v594
          %615 = vst [vmem:[%s278 + $0x3c] sm:$0xf] %v595
        $region44: #{cnn_forward.4} parent=39 // pred_fallthru
          _
        %p616 = scmp.gt.s32.totalorder %s22, 0
        // Predicated region
        $region45: #{cnn_forward.4} parent=39 // pred_check
          %p617 = pneg %p616
        $region46: #{cnn_forward.4} parent=39 // pred_check_branch
          %619 = sbr.rel (%p617) target = $region48
        $region47: #{cnn_forward.4} parent=39 // pred_region
          %v620 = vld [vmem:[%s278] sm:$0xf]
          %v621 = vld [vmem:[%s278 + $0x4] sm:$0xf]
          %v622 = vld [vmem:[%s278 + $0x8] sm:$0xf]
          %v623 = vld [vmem:[%s278 + $0xc] sm:$0xf]
          %v624 = vld [vmem:[%s278 + $0x10] sm:$0xf]
          %v625 = vld [vmem:[%s278 + $0x14] sm:$0xf]
          %v626 = vld [vmem:[%s278 + $0x18] sm:$0xf]
          %v627 = vld [vmem:[%s278 + $0x1c] sm:$0xf]
          %v628 = vld [vmem:[%s278 + $0x20] sm:$0xf]
          %v629 = vld [vmem:[%s278 + $0x24] sm:$0xf]
          %v630 = vld [vmem:[%s278 + $0x28] sm:$0xf]
          %v631 = vld [vmem:[%s278 + $0x2c] sm:$0xf]
          %v632 = vld [vmem:[%s278 + $0x30] sm:$0xf]
          %v633 = vld [vmem:[%s278 + $0x34] sm:$0xf]
          %v634 = vld [vmem:[%s278 + $0x38] sm:$0xf]
          %v635 = vld [vmem:[%s278 + $0x3c] sm:$0xf]
          %v636 = vunpack.c.l.bf16 %v620
          %v637 = vunpack.c.l.bf16 %v621
          %v638 = vunpack.c.l.bf16 %v622
          %v639 = vunpack.c.l.bf16 %v623
          %v640 = vunpack.c.l.bf16 %v624
          %v641 = vunpack.c.l.bf16 %v625
          %v642 = vunpack.c.l.bf16 %v626
          %v643 = vunpack.c.l.bf16 %v627
          %v644 = vunpack.c.l.bf16 %v628
          %v645 = vunpack.c.l.bf16 %v629
          %v646 = vunpack.c.l.bf16 %v630
          %v647 = vunpack.c.l.bf16 %v631
          %v648 = vunpack.c.l.bf16 %v632
          %v649 = vunpack.c.l.bf16 %v633
          %v650 = vunpack.c.l.bf16 %v634
          %v651 = vunpack.c.l.bf16 %v635
          %v652 = vunpack.c.l.bf16 %v580
          %v653 = vunpack.c.l.bf16 %v581
          %v654 = vunpack.c.l.bf16 %v582
          %v655 = vunpack.c.l.bf16 %v583
          %v656 = vunpack.c.l.bf16 %v584
          %v657 = vunpack.c.l.bf16 %v585
          %v658 = vunpack.c.l.bf16 %v586
          %v659 = vunpack.c.l.bf16 %v587
          %v660 = vunpack.c.l.bf16 %v588
          %v661 = vunpack.c.l.bf16 %v589
          %v662 = vunpack.c.l.bf16 %v590
          %v663 = vunpack.c.l.bf16 %v591
          %v664 = vunpack.c.l.bf16 %v592
          %v665 = vunpack.c.l.bf16 %v593
          %v666 = vunpack.c.l.bf16 %v594
          %v667 = vunpack.c.l.bf16 %v595
          %v668 = vmax.f32 %v636, %v652
          %v669 = vmax.f32 %v637, %v653
          %v670 = vmax.f32 %v638, %v654
          %v671 = vmax.f32 %v639, %v655
          %v672 = vmax.f32 %v640, %v656
          %v673 = vmax.f32 %v641, %v657
          %v674 = vmax.f32 %v642, %v658
          %v675 = vmax.f32 %v643, %v659
          %v676 = vmax.f32 %v644, %v660
          %v677 = vmax.f32 %v645, %v661
          %v678 = vmax.f32 %v646, %v662
          %v679 = vmax.f32 %v647, %v663
          %v680 = vmax.f32 %v648, %v664
          %v681 = vmax.f32 %v649, %v665
          %v682 = vmax.f32 %v650, %v666
          %v683 = vmax.f32 %v651, %v667
          %v684 = vpack.c.bf16 %v668, %v668
          %v685 = vpack.c.bf16 %v669, %v669
          %v686 = vpack.c.bf16 %v670, %v670
          %v687 = vpack.c.bf16 %v671, %v671
          %v688 = vpack.c.bf16 %v672, %v672
          %v689 = vpack.c.bf16 %v673, %v673
          %v690 = vpack.c.bf16 %v674, %v674
          %v691 = vpack.c.bf16 %v675, %v675
          %v692 = vpack.c.bf16 %v676, %v676
          %v693 = vpack.c.bf16 %v677, %v677
          %v694 = vpack.c.bf16 %v678, %v678
          %v695 = vpack.c.bf16 %v679, %v679
          %v696 = vpack.c.bf16 %v680, %v680
          %v697 = vpack.c.bf16 %v681, %v681
          %v698 = vpack.c.bf16 %v682, %v682
          %v699 = vpack.c.bf16 %v683, %v683
          %700 = vst [vmem:[%s278] sm:$0xf] %v684
          %701 = vst [vmem:[%s278 + $0x4] sm:$0xf] %v685
          %702 = vst [vmem:[%s278 + $0x8] sm:$0xf] %v686
          %703 = vst [vmem:[%s278 + $0xc] sm:$0xf] %v687
          %704 = vst [vmem:[%s278 + $0x10] sm:$0xf] %v688
          %705 = vst [vmem:[%s278 + $0x14] sm:$0xf] %v689
          %706 = vst [vmem:[%s278 + $0x18] sm:$0xf] %v690
          %707 = vst [vmem:[%s278 + $0x1c] sm:$0xf] %v691
          %708 = vst [vmem:[%s278 + $0x20] sm:$0xf] %v692
          %709 = vst [vmem:[%s278 + $0x24] sm:$0xf] %v693
          %710 = vst [vmem:[%s278 + $0x28] sm:$0xf] %v694
          %711 = vst [vmem:[%s278 + $0x2c] sm:$0xf] %v695
          %712 = vst [vmem:[%s278 + $0x30] sm:$0xf] %v696
          %713 = vst [vmem:[%s278 + $0x34] sm:$0xf] %v697
          %714 = vst [vmem:[%s278 + $0x38] sm:$0xf] %v698
          %715 = vst [vmem:[%s278 + $0x3c] sm:$0xf] %v699
        $region48: #{cnn_forward.4} parent=39 // pred_fallthru
          _
      $region40: #{cnn_forward.4} parent=31 // pred_fallthru
        _
      %s716 = smul.u32 16, %s20
      %p717 = scmp.lt.s32.totalorder %s716, 175
      %s718 = scalar_select %p717, %s716, 175
      %p719 = scmp.lt.s32.totalorder %s21, 0
      %s720 = scalar_select %p719, %s21, 0
      %s721 = sadd.s32 %s720, %s718
      %s722 = smul.addr %s721, 4
      %s723 = scalar_lea.vmem %s3, %s722
      // Predicated region
      $region49: #{cnn_forward.4} parent=31 // pred_check
        %p724 = pneg %p144
      $region50: #{cnn_forward.4} parent=31 // pred_check_branch
        %726 = sbr.rel (%p724) target = $region52
      $region51: #{cnn_forward.4} parent=31 // pred_region
        %s727 = smul.u32 16, %s20
      $region52: #{cnn_forward.4} parent=31 // pred_fallthru
        _
    $region32: #{cnn_forward.4} parent=5 // pred_fallthru
      _
    %p728 = scmp.le.s32.totalorder 2, %s9
    // Predicated region
    $region53: #{cnn_forward.4} parent=5 // pred_check
      %p729 = pneg %p728
    $region54: #{cnn_forward.4} parent=5 // pred_check_branch
      %731 = sbr.rel (%p729) target = $region56
    $region55: #{cnn_forward.4} parent=5 // pred_region
      %s732 = ssub.s32 %s9, 2
      // Predicated region
      $region57: #{cnn_forward.4} parent=55 // pred_check
        %p733 = pneg %p150
      $region58: #{cnn_forward.4} parent=55 // pred_check_branch
        %735 = sbr.rel (%p733) target = $region60
      $region59: #{cnn_forward.4} parent=55 // pred_region
        %s736 = smul.u32 16, %s24
        %p737 = scmp.lt.s32.totalorder %s736, 175
        %s738 = scalar_select %p737, %s736, 175
        %p739 = scmp.lt.s32.totalorder %s25, 0
        %s740 = scalar_select %p739, %s25, 0
        %s741 = sadd.s32 %s740, %s738
        %s742 = smul.addr %s741, 4
        %s743 = scalar_lea.vmem %s3, %s742
      $region60: #{cnn_forward.4} parent=55 // pred_fallthru
        _
    $region56: #{cnn_forward.4} parent=5 // pred_fallthru
      _
  $region6: #{cnn_forward.4} parent=0 // loop_footer
    %s13 = sadd.s32 1, %s9
  $region7: #{cnn_forward.4} parent=0 // loop_footer_branch
    %8 = sbr.rel target = $region3
  $region8: #{cnn_forward.4} parent=0 // loop_exit
    _

// kernel: cnn_forward.5
$region0: #{cnn_forward.5}
  #allocation0 [shape = 'u32[]', space=smem, size = 0x4, offset = 0x4, fixed_abs, tag = 'smem constant byte address 0x4 - core index']
  #allocation1 [shape = 'u32[72,128]{1,0:T(1,128)}', space=vmem, size = 0x9000, scoped, tag = 'internal scratch']
  #allocation2 [shape = 'f32[128,128]{1,0:T(8,128)}', space=vmem, size = 0x10000, scoped, tag = 'scratch operand']
  %s0 = inlined_call_operand.vmem [shape: bf16[4,384,384], index: 0, kind: input, shape index: {}]
  %s1 = inlined_call_operand.vmem [shape: bf16[384,128], index: 1, kind: input, shape index: {}]
  %s2 = inlined_call_operand.vmem [shape: f32[1,128], index: 2, kind: input, shape index: {}]
  %s3 = inlined_call_operand.vmem [shape: bf16[384,128], index: 3, kind: output, shape index: {}]
  %s4 = sld [smem:[#allocation0]]
  $region61: #{cnn_forward.5} parent=0
    _
  %s6 = ssub.s32 1, %s4
  %s7 = scalar_select 0, %s6, %s4
  loop: start=0, step=1, limit=14
  $region2: #{cnn_forward.5} parent=0 // loop_pre_header
    _
  $region3: #{cnn_forward.5} parent=0 // loop_header
    %s9 = sphi 0, %s13
    %p10 = scmp.ge.s32.totalorder %s9, 14
    %s16 = sphi 0, %s42
    %s17 = sphi 0, %s38
    %s18 = sphi 0, %s34
    %s19 = sphi 0, %s30
    %s20 = sphi 0, %s16
    %s21 = sphi 0, %s17
    %s22 = sphi 0, %s18
    %s23 = sphi 0, %s19
    %s24 = sphi 0, %s20
    %s25 = sphi 0, %s21
    %s26 = sphi 0, %s22
    %s27 = sphi 0, %s23
    %s49 = sphi 0, %s51
    %s52 = sphi 0, %s49
    %s53 = sphi 0, %s52
    %s69 = sphi 0, %s53
    %s77 = sphi 0, %s79
    %s80 = sphi 0, %s77
    %s81 = sphi 0, %s80
    %s97 = sphi 0, %s81
    %s103 = sphi 0, %s105
    %s106 = sphi 0, %s103
    %s107 = sphi 0, %s106
    %s123 = sphi 0, %s107
    %s131 = sphi 0, %s133
    %s134 = sphi 0, %s131
    %s135 = sphi 0, %s134
    %s151 = sphi 0, %s135
  $region4: #{cnn_forward.5} parent=0 // loop_header_branch
    %12 = sbr.rel (%p10) target = $region8
  $region5: #{cnn_forward.5} parent=0 // loop_body
    %s14 = ssub.s32 %s9, 1
    %s15 = ssub.s32 %s9, 2
    %s28 = sadd.s32 1, %s19
    %p29 = scmp.ge.s32.totalorder %s28, 1
    %s30 = scalar_select %p29, 0, %s28
    %s31 = sadd.s32 1, %s18
    %s32 = scalar_select %p29, %s31, %s18
    %p33 = scmp.ge.s32.totalorder %s32, 4
    %s34 = scalar_select %p33, 0, %s32
    %s35 = sadd.s32 1, %s17
    %s36 = scalar_select %p33, %s35, %s17
    %p37 = scmp.ge.s32.totalorder %s36, 1
    %s38 = scalar_select %p37, 0, %s36
    %s39 = sadd.s32 1, %s16
    %s40 = scalar_select %p37, %s39, %s16
    %p41 = scmp.ge.s32.totalorder %s40, 3
    %s42 = scalar_select %p41, 0, %s40
    %s43 = ssub.s32 %s18, %s34
    %s44 = ssub.s32 %s16, %s42
    %s45 = sor.u32 %s43, %s44
    %s46 = ssub.s32 %s19, %s30
    %s47 = sor.u32 %s45, %s46
    %p48 = scmp.eq.s32.totalorder %s47, 0
    %s50 = sadd.s32 %s49, 1
    %s51 = scalar_select %p48, %s49, %s50
    %p54 = pneg %p48
    %p55 = scmp.eq.s32.totalorder %s9, 11
    %p56 = por %p54, %p55
    %p57 = scmp.ne.s32.totalorder %s49, %s52
    %p58 = scmp.eq.s32.totalorder %s9, 0
    %p59 = por %p57, %p58
    %p60 = scmp.ne.s32.totalorder %s49, %s52
    %p61 = scmp.eq.s32.totalorder %s14, 11
    %p62 = por %p60, %p61
    %p63 = scmp.ne.s32.totalorder %s52, %s53
    %p64 = scmp.eq.s32.totalorder %s14, 0
    %p65 = por %p63, %p64
    %p66 = scmp.ne.s32.totalorder %s52, %s53
    %p67 = scmp.eq.s32.totalorder %s15, 11
    %p68 = por %p66, %p67
    %p70 = scmp.ne.s32.totalorder %s53, %s69
    %p71 = scmp.eq.s32.totalorder %s15, 0
    %p72 = por %p70, %p71
    %s73 = ssub.s32 %s19, %s30
    %s74 = ssub.s32 %s17, %s38
    %s75 = sor.u32 %s73, %s74
    %p76 = scmp.eq.s32.totalorder %s75, 0
    %s78 = sadd.s32 %s77, 1
    %s79 = scalar_select %p76, %s77, %s78
    %p82 = pneg %p76
    %p83 = scmp.eq.s32.totalorder %s9, 11
    %p84 = por %p82, %p83
    %p85 = scmp.ne.s32.totalorder %s77, %s80
    %p86 = scmp.eq.s32.totalorder %s9, 0
    %p87 = por %p85, %p86
    %p88 = scmp.ne.s32.totalorder %s77, %s80
    %p89 = scmp.eq.s32.totalorder %s14, 11
    %p90 = por %p88, %p89
    %p91 = scmp.ne.s32.totalorder %s80, %s81
    %p92 = scmp.eq.s32.totalorder %s14, 0
    %p93 = por %p91, %p92
    %p94 = scmp.ne.s32.totalorder %s80, %s81
    %p95 = scmp.eq.s32.totalorder %s15, 11
    %p96 = por %p94, %p95
    %p98 = scmp.ne.s32.totalorder %s81, %s97
    %p99 = scmp.eq.s32.totalorder %s15, 0
    %p100 = por %p98, %p99
    %s101 = ssub.s32 %s17, %s38
    %p102 = scmp.eq.s32.totalorder %s101, 0
    %s104 = sadd.s32 %s103, 1
    %s105 = scalar_select %p102, %s103, %s104
    %p108 = pneg %p102
    %p109 = scmp.eq.s32.totalorder %s9, 11
    %p110 = por %p108, %p109
    %p111 = scmp.ne.s32.totalorder %s103, %s106
    %p112 = scmp.eq.s32.totalorder %s9, 0
    %p113 = por %p111, %p112
    %p114 = scmp.ne.s32.totalorder %s103, %s106
    %p115 = scmp.eq.s32.totalorder %s14, 11
    %p116 = por %p114, %p115
    %p117 = scmp.ne.s32.totalorder %s106, %s107
    %p118 = scmp.eq.s32.totalorder %s14, 0
    %p119 = por %p117, %p118
    %p120 = scmp.ne.s32.totalorder %s106, %s107
    %p121 = scmp.eq.s32.totalorder %s15, 11
    %p122 = por %p120, %p121
    %p124 = scmp.ne.s32.totalorder %s107, %s123
    %p125 = scmp.eq.s32.totalorder %s15, 0
    %p126 = por %p124, %p125
    %s127 = ssub.s32 %s16, %s42
    %s128 = ssub.s32 %s17, %s38
    %s129 = sor.u32 %s127, %s128
    %p130 = scmp.eq.s32.totalorder %s129, 0
    %s132 = sadd.s32 %s131, 1
    %s133 = scalar_select %p130, %s131, %s132
    %p136 = pneg %p130
    %p137 = scmp.eq.s32.totalorder %s9, 11
    %p138 = por %p136, %p137
    %p139 = scmp.ne.s32.totalorder %s131, %s134
    %p140 = scmp.eq.s32.totalorder %s9, 0
    %p141 = por %p139, %p140
    %p142 = scmp.ne.s32.totalorder %s131, %s134
    %p143 = scmp.eq.s32.totalorder %s14, 11
    %p144 = por %p142, %p143
    %p145 = scmp.ne.s32.totalorder %s134, %s135
    %p146 = scmp.eq.s32.totalorder %s14, 0
    %p147 = por %p145, %p146
    %p148 = scmp.ne.s32.totalorder %s134, %s135
    %p149 = scmp.eq.s32.totalorder %s15, 11
    %p150 = por %p148, %p149
    %p152 = scmp.ne.s32.totalorder %s135, %s151
    %p153 = scmp.eq.s32.totalorder %s15, 0
    %p154 = por %p152, %p153
    %p155 = scmp.le.s32.totalorder 1, %s9
    %p156 = scmp.lt.s32.totalorder %s9, 13
    %p157 = pnand %p155, %p156
    %p158 = pneg %p157
    // Predicated region
    $region9: #{cnn_forward.5} parent=5 // pred_check
      _
    $region10: #{cnn_forward.5} parent=5 // pred_check_branch
      %160 = sbr.rel (%p157) target = $region12
    $region11: #{cnn_forward.5} parent=5 // pred_region
      %s161 = ssub.s32 %s9, 1
      // Predicated region
      $region13: #{cnn_forward.5} parent=11 // pred_check
        %p162 = pneg %p93
      $region14: #{cnn_forward.5} parent=11 // pred_check_branch
        %164 = sbr.rel (%p162) target = $region16
      $region15: #{cnn_forward.5} parent=11 // pred_region
        %s165 = smul.u32 48, %s23
        %p166 = scmp.lt.s32.totalorder %s165, 47
        %s167 = scalar_select %p166, %s165, 47
        %p168 = scmp.lt.s32.totalorder %s21, 0
        %s169 = scalar_select %p168, %s21, 0
        %s170 = sadd.s32 %s169, %s167
        %s171 = smul.addr %s170, 4
        %s172 = scalar_lea.vmem %s1, %s171
        %s173 = smul.u32 48, %s23
      $region16: #{cnn_forward.5} parent=11 // pred_fallthru
        _
      // Predicated region
      $region17: #{cnn_forward.5} parent=11 // pred_check
        %p174 = pneg %p119
      $region18: #{cnn_forward.5} parent=11 // pred_check_branch
        %176 = sbr.rel (%p174) target = $region20
      $region19: #{cnn_forward.5} parent=11 // pred_region
        %p177 = scmp.lt.s32.totalorder %s21, 0
        %s178 = scalar_select %p177, %s21, 0
        %s179 = scalar_lea.vmem %s2, %s178
      $region20: #{cnn_forward.5} parent=11 // pred_fallthru
        _
    $region12: #{cnn_forward.5} parent=5 // pred_fallthru
      _
    %p180 = scmp.lt.s32.totalorder %s9, 12
    // Predicated region
    $region21: #{cnn_forward.5} parent=5 // pred_check
      %p181 = pneg %p180
    $region22: #{cnn_forward.5} parent=5 // pred_check_branch
      %183 = sbr.rel (%p181) target = $region24
    $region23: #{cnn_forward.5} parent=5 // pred_region
      // Predicated region
      $region25: #{cnn_forward.5} parent=23 // pred_check
        %p184 = pneg %p59
      $region26: #{cnn_forward.5} parent=23 // pred_check_branch
        %186 = sbr.rel (%p184) target = $region28
      $region27: #{cnn_forward.5} parent=23 // pred_region
        %s187 = smul.u32 16, %s16
        %s188 = smul.u32 3, %s19
        %p189 = scmp.lt.s32.totalorder %s18, 3
        %s190 = scalar_select %p189, %s18, 3
        %p191 = scmp.lt.s32.totalorder %s187, 47
        %s192 = scalar_select %p191, %s187, 47
        %p193 = scmp.lt.s32.totalorder %s188, 2
        %s194 = scalar_select %p193, %s188, 2
        %s195 = smul.addr %s192, 3
        %s196 = sadd.s32 %s194, %s195
        %s197 = smul.addr %s190, 144
        %s198 = sadd.s32 %s196, %s197
        %s199 = smul.addr %s198, 4
        %s200 = scalar_lea.vmem %s0, %s199
        %s201 = smul.u32 16, %s16
        %s202 = smul.u32 3, %s19
      $region28: #{cnn_forward.5} parent=23 // pred_fallthru
        _
    $region24: #{cnn_forward.5} parent=5 // pred_fallthru
      _
    %p203 = scmp.le.s32.totalorder 1, %s9
    %p204 = scmp.lt.s32.totalorder %s9, 13
    %p205 = pnand %p203, %p204
    %p206 = pneg %p205
    // Predicated region
    $region29: #{cnn_forward.5} parent=5 // pred_check
      _
    $region30: #{cnn_forward.5} parent=5 // pred_check_branch
      %208 = sbr.rel (%p205) target = $region32
    $region31: #{cnn_forward.5} parent=5 // pred_region
      %s209 = ssub.s32 %s9, 1
      %s210 = smul.u32 16, %s20
      %s211 = smul.u32 3, %s23
      %p212 = scmp.lt.s32.totalorder %s22, 3
      %s213 = scalar_select %p212, %s22, 3
      %p214 = scmp.lt.s32.totalorder %s210, 47
      %s215 = scalar_select %p214, %s210, 47
      %p216 = scmp.lt.s32.totalorder %s211, 2
      %s217 = scalar_select %p216, %s211, 2
      %s218 = smul.addr %s215, 3
      %s219 = sadd.s32 %s217, %s218
      %s220 = smul.addr %s213, 144
      %s221 = sadd.s32 %s219, %s220
      %s222 = smul.addr %s221, 4
      %s223 = scalar_lea.vmem %s0, %s222
      %p224 = pneg %p65
      %p225 = pneg %p62
      %s226 = smul.u32 48, %s23
      %p227 = scmp.lt.s32.totalorder %s226, 47
      %s228 = scalar_select %p227, %s226, 47
      %p229 = scmp.lt.s32.totalorder %s21, 0
      %s230 = scalar_select %p229, %s21, 0
      %s231 = sadd.s32 %s230, %s228
      %s232 = smul.addr %s231, 4
      %s233 = scalar_lea.vmem %s1, %s232
      %p234 = pneg %p93
      %p235 = pneg %p90
      %p236 = scmp.lt.s32.totalorder %s21, 0
      %s237 = scalar_select %p236, %s21, 0
      %s238 = scalar_lea.vmem %s2, %s237
      %p239 = pneg %p119
      %p240 = pneg %p116
      %p241 = pneg %p147
      %p242 = pneg %p144
      %s243 = smul.u32 16, %s20
      %p244 = scmp.lt.s32.totalorder %s243, 47
      %s245 = scalar_select %p244, %s243, 47
      %p246 = scmp.lt.s32.totalorder %s21, 0
      %s247 = scalar_select %p246, %s21, 0
      %s248 = sadd.s32 %s247, %s245
      %s249 = smul.addr %s248, 4
      %s250 = scalar_lea.vmem %s3, %s249
      %s251 = smul.u32 16, %s20
      %s252 = smul.u32 3, %s23
      %p253 = scmp.lt.s32.totalorder %s22, 3
      %s254 = scalar_select %p253, %s22, 3
      %p255 = scmp.lt.s32.totalorder %s251, 47
      %s256 = scalar_select %p255, %s251, 47
      %p257 = scmp.lt.s32.totalorder %s252, 2
      %s258 = scalar_select %p257, %s252, 2
      %s259 = smul.addr %s256, 3
      %s260 = sadd.s32 %s258, %s259
      %s261 = smul.addr %s254, 144
      %s262 = sadd.s32 %s260, %s261
      %s263 = smul.addr %s262, 4
      %s264 = scalar_lea.vmem %s0, %s263
      %s265 = smul.u32 16, %s20
      %s266 = smul.u32 3, %s23
      %s267 = smul.u32 48, %s23
      %p268 = scmp.lt.s32.totalorder %s267, 47
      %s269 = scalar_select %p268, %s267, 47
      %p270 = scmp.lt.s32.totalorder %s21, 0
      %s271 = scalar_select %p270, %s21, 0
      %s272 = sadd.s32 %s271, %s269
      %s273 = smul.addr %s272, 4
      %s274 = scalar_lea.vmem %s1, %s273
      %s275 = smul.u32 48, %s23
      %p276 = scmp.lt.s32.totalorder %s21, 0
      %s277 = scalar_select %p276, %s21, 0
      %s278 = scalar_lea.vmem %s2, %s277
      %s279 = smul.u32 16, %s20
      %p280 = scmp.lt.s32.totalorder %s279, 47
      %s281 = scalar_select %p280, %s279, 47
      %p282 = scmp.lt.s32.totalorder %s21, 0
      %s283 = scalar_select %p282, %s21, 0
      %s284 = sadd.s32 %s283, %s281
      %s285 = smul.addr %s284, 4
      %s286 = scalar_lea.vmem %s3, %s285
      %s287 = smul.u32 16, %s20
      %p288 = scmp.eq.s32.totalorder %s23, 0
      // Predicated region
      $region33: #{cnn_forward.5} parent=31 // pred_check
        %p289 = pneg %p288
      $region34: #{cnn_forward.5} parent=31 // pred_check_branch
        %291 = sbr.rel (%p289) target = $region36
      $region35: #{cnn_forward.5} parent=31 // pred_region
        %292 = vst [vmem:[#allocation2] sm:$0xff] 0.0
        %293 = vst [vmem:[#allocation2 + $0x8] sm:$0xff] 0.0
        %294 = vst [vmem:[#allocation2 + $0x10] sm:$0xff] 0.0
        %295 = vst [vmem:[#allocation2 + $0x18] sm:$0xff] 0.0
        %296 = vst [vmem:[#allocation2 + $0x20] sm:$0xff] 0.0
        %297 = vst [vmem:[#allocation2 + $0x28] sm:$0xff] 0.0
        %298 = vst [vmem:[#allocation2 + $0x30] sm:$0xff] 0.0
        %299 = vst [vmem:[#allocation2 + $0x38] sm:$0xff] 0.0
        %300 = vst [vmem:[#allocation2 + $0x40] sm:$0xff] 0.0
        %301 = vst [vmem:[#allocation2 + $0x48] sm:$0xff] 0.0
        %302 = vst [vmem:[#allocation2 + $0x50] sm:$0xff] 0.0
        %303 = vst [vmem:[#allocation2 + $0x58] sm:$0xff] 0.0
        %304 = vst [vmem:[#allocation2 + $0x60] sm:$0xff] 0.0
        %305 = vst [vmem:[#allocation2 + $0x68] sm:$0xff] 0.0
        %306 = vst [vmem:[#allocation2 + $0x70] sm:$0xff] 0.0
        %307 = vst [vmem:[#allocation2 + $0x78] sm:$0xff] 0.0
      $region36: #{cnn_forward.5} parent=31 // pred_fallthru
        _
      %v308 = vld [vmem:[#allocation2] sm:$0xff]
      %v309 = vld [vmem:[#allocation2 + $0x8] sm:$0xff]
      %v310 = vld [vmem:[#allocation2 + $0x10] sm:$0xff]
      %v311 = vld [vmem:[#allocation2 + $0x18] sm:$0xff]
      %v312 = vld [vmem:[#allocation2 + $0x20] sm:$0xff]
      %v313 = vld [vmem:[#allocation2 + $0x28] sm:$0xff]
      %v314 = vld [vmem:[#allocation2 + $0x30] sm:$0xff]
      %v315 = vld [vmem:[#allocation2 + $0x38] sm:$0xff]
      %v316 = vld [vmem:[#allocation2 + $0x40] sm:$0xff]
      %v317 = vld [vmem:[#allocation2 + $0x48] sm:$0xff]
      %v318 = vld [vmem:[#allocation2 + $0x50] sm:$0xff]
      %v319 = vld [vmem:[#allocation2 + $0x58] sm:$0xff]
      %v320 = vld [vmem:[#allocation2 + $0x60] sm:$0xff]
      %v321 = vld [vmem:[#allocation2 + $0x68] sm:$0xff]
      %v322 = vld [vmem:[#allocation2 + $0x70] sm:$0xff]
      %v323 = vld [vmem:[#allocation2 + $0x78] sm:$0xff]
      %v324 = vld [vmem:[%s264] sm:$0xff]
      %v325 = vld [vmem:[%s264 + $0x8] sm:$0xf]
      %v326 = vld [vmem:[%s264 + $0xc] sm:$0xff]
      %v327 = vld [vmem:[%s264 + $0x14] sm:$0xf]
      %v328 = vld [vmem:[%s264 + $0x18] sm:$0xff]
      %v329 = vld [vmem:[%s264 + $0x20] sm:$0xf]
      %v330 = vld [vmem:[%s264 + $0x24] sm:$0xff]
      %v331 = vld [vmem:[%s264 + $0x2c] sm:$0xf]
      %v332 = vld [vmem:[%s264 + $0x30] sm:$0xff]
      %v333 = vld [vmem:[%s264 + $0x38] sm:$0xf]
      %v334 = vld [vmem:[%s264 + $0x3c] sm:$0xff]
      %v335 = vld [vmem:[%s264 + $0x44] sm:$0xf]
      %v336 = vld [vmem:[%s264 + $0x48] sm:$0xff]
      %v337 = vld [vmem:[%s264 + $0x50] sm:$0xf]
      %v338 = vld [vmem:[%s264 + $0x54] sm:$0xff]
      %v339 = vld [vmem:[%s264 + $0x5c] sm:$0xf]
      %v340 = vld [vmem:[%s264 + $0x60] sm:$0xff]
      %v341 = vld [vmem:[%s264 + $0x68] sm:$0xf]
      %v342 = vld [vmem:[%s264 + $0x6c] sm:$0xff]
      %v343 = vld [vmem:[%s264 + $0x74] sm:$0xf]
      %v344 = vld [vmem:[%s264 + $0x78] sm:$0xff]
      %v345 = vld [vmem:[%s264 + $0x80] sm:$0xf]
      %v346 = vld [vmem:[%s264 + $0x84] sm:$0xff]
      %v347 = vld [vmem:[%s264 + $0x8c] sm:$0xf]
      %v348 = vld [vmem:[%s264 + $0x90] sm:$0xff]
      %v349 = vld [vmem:[%s264 + $0x98] sm:$0xf]
      %v350 = vld [vmem:[%s264 + $0x9c] sm:$0xff]
      %v351 = vld [vmem:[%s264 + $0xa4] sm:$0xf]
      %v352 = vld [vmem:[%s264 + $0xa8] sm:$0xff]
      %v353 = vld [vmem:[%s264 + $0xb0] sm:$0xf]
      %v354 = vld [vmem:[%s264 + $0xb4] sm:$0xff]
      %v355 = vld [vmem:[%s264 + $0xbc] sm:$0xf]
      %v356 = vld [vmem:[%s274] sm:$0xf]
      %v357 = vld [vmem:[%s274 + $0x4] sm:$0xf]
      %v358 = vld [vmem:[%s274 + $0x8] sm:$0xf]
      %v359 = vld [vmem:[%s274 + $0xc] sm:$0xf]
      %v360 = vld [vmem:[%s274 + $0x10] sm:$0xf]
      %v361 = vld [vmem:[%s274 + $0x14] sm:$0xf]
      %v362 = vld [vmem:[%s274 + $0x18] sm:$0xf]
      %v363 = vld [vmem:[%s274 + $0x1c] sm:$0xf]
      %v364 = vld [vmem:[%s274 + $0x20] sm:$0xf]
      %v365 = vld [vmem:[%s274 + $0x24] sm:$0xf]
      %v366 = vld [vmem:[%s274 + $0x28] sm:$0xf]
      %v367 = vld [vmem:[%s274 + $0x2c] sm:$0xf]
      %v368 = vld [vmem:[%s274 + $0x30] sm:$0xf]
      %v369 = vld [vmem:[%s274 + $0x34] sm:$0xf]
      %v370 = vld [vmem:[%s274 + $0x38] sm:$0xf]
      %v371 = vld [vmem:[%s274 + $0x3c] sm:$0xf]
      %v372 = vld [vmem:[%s274 + $0x40] sm:$0xf]
      %v373 = vld [vmem:[%s274 + $0x44] sm:$0xf]
      %v374 = vld [vmem:[%s274 + $0x48] sm:$0xf]
      %v375 = vld [vmem:[%s274 + $0x4c] sm:$0xf]
      %v376 = vld [vmem:[%s274 + $0x50] sm:$0xf]
      %v377 = vld [vmem:[%s274 + $0x54] sm:$0xf]
      %v378 = vld [vmem:[%s274 + $0x58] sm:$0xf]
      %v379 = vld [vmem:[%s274 + $0x5c] sm:$0xf]
      %v380 = vld [vmem:[%s274 + $0x60] sm:$0xf]
      %v381 = vld [vmem:[%s274 + $0x64] sm:$0xf]
      %v382 = vld [vmem:[%s274 + $0x68] sm:$0xf]
      %v383 = vld [vmem:[%s274 + $0x6c] sm:$0xf]
      %v384 = vld [vmem:[%s274 + $0x70] sm:$0xf]
      %v385 = vld [vmem:[%s274 + $0x74] sm:$0xf]
      %v386 = vld [vmem:[%s274 + $0x78] sm:$0xf]
      %v387 = vld [vmem:[%s274 + $0x7c] sm:$0xf]
      %v388 = vld [vmem:[%s274 + $0x80] sm:$0xf]
      %v389 = vld [vmem:[%s274 + $0x84] sm:$0xf]
      %v390 = vld [vmem:[%s274 + $0x88] sm:$0xf]
      %v391 = vld [vmem:[%s274 + $0x8c] sm:$0xf]
      %v392 = vld [vmem:[%s274 + $0x90] sm:$0xf]
      %v393 = vld [vmem:[%s274 + $0x94] sm:$0xf]
      %v394 = vld [vmem:[%s274 + $0x98] sm:$0xf]
      %v395 = vld [vmem:[%s274 + $0x9c] sm:$0xf]
      %v396 = vld [vmem:[%s274 + $0xa0] sm:$0xf]
      %v397 = vld [vmem:[%s274 + $0xa4] sm:$0xf]
      %v398 = vld [vmem:[%s274 + $0xa8] sm:$0xf]
      %v399 = vld [vmem:[%s274 + $0xac] sm:$0xf]
      %v400 = vld [vmem:[%s274 + $0xb0] sm:$0xf]
      %v401 = vld [vmem:[%s274 + $0xb4] sm:$0xf]
      %v402 = vld [vmem:[%s274 + $0xb8] sm:$0xf]
      %v403 = vld [vmem:[%s274 + $0xbc] sm:$0xf]
      %v436 = vunpack.c.l.b16 %v324
      %v437 = vunpack.c.h.b16 %v324
      %v438 = vunpack.c.l.b16 %v325
      %v439 = vunpack.c.l.b16 %v326
      %v440 = vunpack.c.h.b16 %v326
      %v441 = vunpack.c.l.b16 %v327
      %v442 = vunpack.c.l.b16 %v328
      %v443 = vunpack.c.h.b16 %v328
      %v444 = vunpack.c.l.b16 %v329
      %v445 = vunpack.c.l.b16 %v330
      %v446 = vunpack.c.h.b16 %v330
      %v447 = vunpack.c.l.b16 %v331
      %v448 = vunpack.c.l.b16 %v332
      %v449 = vunpack.c.h.b16 %v332
      %v450 = vunpack.c.l.b16 %v333
      %v451 = vunpack.c.l.b16 %v334
      %v452 = vunpack.c.h.b16 %v334
      %v453 = vunpack.c.l.b16 %v335
      %v454 = vunpack.c.l.b16 %v336
      %v455 = vunpack.c.h.b16 %v336
      %v456 = vunpack.c.l.b16 %v337
      %v457 = vunpack.c.l.b16 %v338
      %v458 = vunpack.c.h.b16 %v338
      %v459 = vunpack.c.l.b16 %v339
      %v460 = vunpack.c.l.b16 %v340
      %v461 = vunpack.c.h.b16 %v340
      %v462 = vunpack.c.l.b16 %v341
      %v463 = vunpack.c.l.b16 %v342
      %v464 = vunpack.c.h.b16 %v342
      %v465 = vunpack.c.l.b16 %v343
      %v466 = vunpack.c.l.b16 %v344
      %v467 = vunpack.c.h.b16 %v344
      %v468 = vunpack.c.l.b16 %v345
      %v469 = vunpack.c.l.b16 %v346
      %v470 = vunpack.c.h.b16 %v346
      %v471 = vunpack.c.l.b16 %v347
      %v472 = vunpack.c.l.b16 %v348
      %v473 = vunpack.c.h.b16 %v348
      %v474 = vunpack.c.l.b16 %v349
      %v475 = vunpack.c.l.b16 %v350
      %v476 = vunpack.c.h.b16 %v350
      %v477 = vunpack.c.l.b16 %v351
      %v478 = vunpack.c.l.b16 %v352
      %v479 = vunpack.c.h.b16 %v352
      %v480 = vunpack.c.l.b16 %v353
      %v481 = vunpack.c.l.b16 %v354
      %v482 = vunpack.c.h.b16 %v354
      %v483 = vunpack.c.l.b16 %v355
      %v484 = vpack.c.b16 %v439, %v436
      %v485 = vpack.c.b16 %v440, %v437
      %v486 = vpack.c.b16 %v441, %v438
      %v487 = vpack.c.b16 %v445, %v442
      %v488 = vpack.c.b16 %v446, %v443
      %v489 = vpack.c.b16 %v447, %v444
      %v490 = vpack.c.b16 %v451, %v448
      %v491 = vpack.c.b16 %v452, %v449
      %v492 = vpack.c.b16 %v453, %v450
      %v493 = vpack.c.b16 %v457, %v454
      %v494 = vpack.c.b16 %v458, %v455
      %v495 = vpack.c.b16 %v459, %v456
      %v496 = vpack.c.b16 %v463, %v460
      %v497 = vpack.c.b16 %v464, %v461
      %v498 = vpack.c.b16 %v465, %v462
      %v499 = vpack.c.b16 %v469, %v466
      %v500 = vpack.c.b16 %v470, %v467
      %v501 = vpack.c.b16 %v471, %v468
      %v502 = vpack.c.b16 %v475, %v472
      %v503 = vpack.c.b16 %v476, %v473
      %v504 = vpack.c.b16 %v477, %v474
      %v505 = vpack.c.b16 %v481, %v478
      %v506 = vpack.c.b16 %v482, %v479
      %v507 = vpack.c.b16 %v483, %v480
      %v580 = vunpack.c.l.b16 %v356
      %v581 = vunpack.c.l.b16 %v357
      %v582 = vunpack.c.l.b16 %v358
      %v583 = vunpack.c.l.b16 %v359
      %v584 = vunpack.c.l.b16 %v360
      %v585 = vunpack.c.l.b16 %v361
      %v586 = vunpack.c.l.b16 %v362
      %v587 = vunpack.c.l.b16 %v363
      %v588 = vunpack.c.l.b16 %v364
      %v589 = vunpack.c.l.b16 %v365
      %v590 = vunpack.c.l.b16 %v366
      %v591 = vunpack.c.l.b16 %v367
      %v592 = vunpack.c.l.b16 %v368
      %v593 = vunpack.c.l.b16 %v369
      %v594 = vunpack.c.l.b16 %v370
      %v595 = vunpack.c.l.b16 %v371
      %v596 = vunpack.c.l.b16 %v372
      %v597 = vunpack.c.l.b16 %v373
      %v598 = vunpack.c.l.b16 %v374
      %v599 = vunpack.c.l.b16 %v375
      %v600 = vunpack.c.l.b16 %v376
      %v601 = vunpack.c.l.b16 %v377
      %v602 = vunpack.c.l.b16 %v378
      %v603 = vunpack.c.l.b16 %v379
      %v604 = vunpack.c.l.b16 %v380
      %v605 = vunpack.c.l.b16 %v381
      %v606 = vunpack.c.l.b16 %v382
      %v607 = vunpack.c.l.b16 %v383
      %v608 = vunpack.c.l.b16 %v384
      %v609 = vunpack.c.l.b16 %v385
      %v610 = vunpack.c.l.b16 %v386
      %v611 = vunpack.c.l.b16 %v387
      %v612 = vunpack.c.l.b16 %v388
      %v613 = vunpack.c.l.b16 %v389
      %v614 = vunpack.c.l.b16 %v390
      %v615 = vunpack.c.l.b16 %v391
      %v616 = vunpack.c.l.b16 %v392
      %v617 = vunpack.c.l.b16 %v393
      %v618 = vunpack.c.l.b16 %v394
      %v619 = vunpack.c.l.b16 %v395
      %v620 = vunpack.c.l.b16 %v396
      %v621 = vunpack.c.l.b16 %v397
      %v622 = vunpack.c.l.b16 %v398
      %v623 = vunpack.c.l.b16 %v399
      %v624 = vunpack.c.l.b16 %v400
      %v625 = vunpack.c.l.b16 %v401
      %v626 = vunpack.c.l.b16 %v402
      %v627 = vunpack.c.l.b16 %v403
      %v628 = vpack.c.b16 %v581, %v580
      %v629 = vpack.c.b16 %v583, %v582
      %v630 = vpack.c.b16 %v585, %v584
      %v631 = vpack.c.b16 %v587, %v586
      %v632 = vpack.c.b16 %v589, %v588
      %v633 = vpack.c.b16 %v591, %v590
      %v634 = vpack.c.b16 %v593, %v592
      %v635 = vpack.c.b16 %v595, %v594
      %v636 = vpack.c.b16 %v597, %v596
      %v637 = vpack.c.b16 %v599, %v598
      %v638 = vpack.c.b16 %v601, %v600
      %v639 = vpack.c.b16 %v603, %v602
      %v640 = vpack.c.b16 %v605, %v604
      %v641 = vpack.c.b16 %v607, %v606
      %v642 = vpack.c.b16 %v609, %v608
      %v643 = vpack.c.b16 %v611, %v610
      %v644 = vpack.c.b16 %v613, %v612
      %v645 = vpack.c.b16 %v615, %v614
      %v646 = vpack.c.b16 %v617, %v616
      %v647 = vpack.c.b16 %v619, %v618
      %v648 = vpack.c.b16 %v621, %v620
      %v649 = vpack.c.b16 %v623, %v622
      %v650 = vpack.c.b16 %v625, %v624
      %v651 = vpack.c.b16 %v627, %v626
      %676 = vmatpush.bf16.msra.mxu0 %v635
      %677 = vmatpush.bf16.msra.mxu0 %v634
      %678 = vmatpush.bf16.msra.mxu0 %v633
      %679 = vmatpush.bf16.msra.mxu0 %v632
      %680 = vmatpush.bf16.msra.mxu0 %v631
      %681 = vmatpush.bf16.msra.mxu0 %v630
      %682 = vmatpush.bf16.msra.mxu0 %v629
      %683 = vmatpush.bf16.msra.mxu0 %v628
      %684 = vmatmul.bf16.gmra.mxu0 %v484
      %v685 = vpop.f32.mrf.mxu0
      %v686 = vadd.f32 0.0, %v685
      %v687 = vpop.f32.mrf.mxu0
      %v688 = vadd.f32 0.0, %v687
      %689 = vmatmul.bf16.gmra.mxu0 %v487
      %v690 = vpop.f32.mrf.mxu0
      %v691 = vadd.f32 0.0, %v690
      %v692 = vpop.f32.mrf.mxu0
      %v693 = vadd.f32 0.0, %v692
      %694 = vmatmul.bf16.gmra.mxu0 %v490
      %v695 = vpop.f32.mrf.mxu0
      %v696 = vadd.f32 0.0, %v695
      %v697 = vpop.f32.mrf.mxu0
      %v698 = vadd.f32 0.0, %v697
      %699 = vmatmul.bf16.gmra.mxu0 %v493
      %v700 = vpop.f32.mrf.mxu0
      %v701 = vadd.f32 0.0, %v700
      %v702 = vpop.f32.mrf.mxu0
      %v703 = vadd.f32 0.0, %v702
      %704 = vmatmul.bf16.gmra.mxu0 %v496
      %v705 = vpop.f32.mrf.mxu0
      %v706 = vadd.f32 0.0, %v705
      %v707 = vpop.f32.mrf.mxu0
      %v708 = vadd.f32 0.0, %v707
      %709 = vmatmul.bf16.gmra.mxu0 %v499
      %v710 = vpop.f32.mrf.mxu0
      %v711 = vadd.f32 0.0, %v710
      %v712 = vpop.f32.mrf.mxu0
      %v713 = vadd.f32 0.0, %v712
      %714 = vmatmul.bf16.gmra.mxu0 %v502
      %v715 = vpop.f32.mrf.mxu0
      %v716 = vadd.f32 0.0, %v715
      %v717 = vpop.f32.mrf.mxu0
      %v718 = vadd.f32 0.0, %v717
      %719 = vmatmul.bf16.gmra.mxu0 %v505
      %v720 = vpop.f32.mrf.mxu0
      %v721 = vadd.f32 0.0, %v720
      %v722 = vpop.f32.mrf.mxu0
      %v723 = vadd.f32 0.0, %v722
      %724 = vdwg.mxu0
      %725 = vmatpush.bf16.msra.mxu0 %v643
      %726 = vmatpush.bf16.msra.mxu0 %v642
      %727 = vmatpush.bf16.msra.mxu0 %v641
      %728 = vmatpush.bf16.msra.mxu0 %v640
      %729 = vmatpush.bf16.msra.mxu0 %v639
      %730 = vmatpush.bf16.msra.mxu0 %v638
      %731 = vmatpush.bf16.msra.mxu0 %v637
      %732 = vmatpush.bf16.msra.mxu0 %v636
      %733 = vmatmul.bf16.gmra.mxu0 %v485
      %v734 = vpop.f32.mrf.mxu0
      %v735 = vadd.f32 %v686, %v734
      %v736 = vpop.f32.mrf.mxu0
      %v737 = vadd.f32 %v688, %v736
      %738 = vmatmul.bf16.gmra.mxu0 %v488
      %v739 = vpop.f32.mrf.mxu0
      %v740 = vadd.f32 %v691, %v739
      %v741 = vpop.f32.mrf.mxu0
      %v742 = vadd.f32 %v693, %v741
      %743 = vmatmul.bf16.gmra.mxu0 %v491
      %v744 = vpop.f32.mrf.mxu0
      %v745 = vadd.f32 %v696, %v744
      %v746 = vpop.f32.mrf.mxu0
      %v747 = vadd.f32 %v698, %v746
      %748 = vmatmul.bf16.gmra.mxu0 %v494
      %v749 = vpop.f32.mrf.mxu0
      %v750 = vadd.f32 %v701, %v749
      %v751 = vpop.f32.mrf.mxu0
      %v752 = vadd.f32 %v703, %v751
      %753 = vmatmul.bf16.gmra.mxu0 %v497
      %v754 = vpop.f32.mrf.mxu0
      %v755 = vadd.f32 %v706, %v754
      %v756 = vpop.f32.mrf.mxu0
      %v757 = vadd.f32 %v708, %v756
      %758 = vmatmul.bf16.gmra.mxu0 %v500
      %v759 = vpop.f32.mrf.mxu0
      %v760 = vadd.f32 %v711, %v759
      %v761 = vpop.f32.mrf.mxu0
      %v762 = vadd.f32 %v713, %v761
      %763 = vmatmul.bf16.gmra.mxu0 %v503
      %v764 = vpop.f32.mrf.mxu0
      %v765 = vadd.f32 %v716, %v764
      %v766 = vpop.f32.mrf.mxu0
      %v767 = vadd.f32 %v718, %v766
      %768 = vmatmul.bf16.gmra.mxu0 %v506
      %v769 = vpop.f32.mrf.mxu0
      %v770 = vadd.f32 %v721, %v769
      %v771 = vpop.f32.mrf.mxu0
      %v772 = vadd.f32 %v723, %v771
      %773 = vdwg.mxu0
      %774 = vmatpush.bf16.msra.mxu0 %v651
      %775 = vmatpush.bf16.msra.mxu0 %v650
      %776 = vmatpush.bf16.msra.mxu0 %v649
      %777 = vmatpush.bf16.msra.mxu0 %v648
      %778 = vmatpush.bf16.msra.mxu0 %v647
      %779 = vmatpush.bf16.msra.mxu0 %v646
      %780 = vmatpush.bf16.msra.mxu0 %v645
      %781 = vmatpush.bf16.msra.mxu0 %v644
      %782 = vmatmul.bf16.gmra.mxu0 %v486
      %v783 = vpop.f32.mrf.mxu0
      %v784 = vadd.f32 %v735, %v783
      %v785 = vpop.f32.mrf.mxu0
      %v786 = vadd.f32 %v737, %v785
      %787 = vmatmul.bf16.gmra.mxu0 %v489
      %v788 = vpop.f32.mrf.mxu0
      %v789 = vadd.f32 %v740, %v788
      %v790 = vpop.f32.mrf.mxu0
      %v791 = vadd.f32 %v742, %v790
      %792 = vmatmul.bf16.gmra.mxu0 %v492
      %v793 = vpop.f32.mrf.mxu0
      %v794 = vadd.f32 %v745, %v793
      %v795 = vpop.f32.mrf.mxu0
      %v796 = vadd.f32 %v747, %v795
      %797 = vmatmul.bf16.gmra.mxu0 %v495
      %v798 = vpop.f32.mrf.mxu0
      %v799 = vadd.f32 %v750, %v798
      %v800 = vpop.f32.mrf.mxu0
      %v801 = vadd.f32 %v752, %v800
      %802 = vmatmul.bf16.gmra.mxu0 %v498
      %v803 = vpop.f32.mrf.mxu0
      %v804 = vadd.f32 %v755, %v803
      %v805 = vpop.f32.mrf.mxu0
      %v806 = vadd.f32 %v757, %v805
      %807 = vmatmul.bf16.gmra.mxu0 %v501
      %v808 = vpop.f32.mrf.mxu0
      %v809 = vadd.f32 %v760, %v808
      %v810 = vpop.f32.mrf.mxu0
      %v811 = vadd.f32 %v762, %v810
      %812 = vmatmul.bf16.gmra.mxu0 %v504
      %v813 = vpop.f32.mrf.mxu0
      %v814 = vadd.f32 %v765, %v813
      %v815 = vpop.f32.mrf.mxu0
      %v816 = vadd.f32 %v767, %v815
      %817 = vmatmul.bf16.gmra.mxu0 %v507
      %v818 = vpop.f32.mrf.mxu0
      %v819 = vadd.f32 %v770, %v818
      %v820 = vpop.f32.mrf.mxu0
      %v821 = vadd.f32 %v772, %v820
      %822 = vdwg.mxu0
      %v823 = vadd.f32 %v308, %v784
      %v824 = vadd.f32 %v309, %v786
      %v825 = vadd.f32 %v310, %v789
      %v826 = vadd.f32 %v311, %v791
      %v827 = vadd.f32 %v312, %v794
      %v828 = vadd.f32 %v313, %v796
      %v829 = vadd.f32 %v314, %v799
      %v830 = vadd.f32 %v315, %v801
      %v831 = vadd.f32 %v316, %v804
      %v832 = vadd.f32 %v317, %v806
      %v833 = vadd.f32 %v318, %v809
      %v834 = vadd.f32 %v319, %v811
      %v835 = vadd.f32 %v320, %v814
      %v836 = vadd.f32 %v321, %v816
      %v837 = vadd.f32 %v322, %v819
      %v838 = vadd.f32 %v323, %v821
      %839 = vst [vmem:[#allocation2] sm:$0xff] %v823
      %840 = vst [vmem:[#allocation2 + $0x8] sm:$0xff] %v824
      %841 = vst [vmem:[#allocation2 + $0x10] sm:$0xff] %v825
      %842 = vst [vmem:[#allocation2 + $0x18] sm:$0xff] %v826
      %843 = vst [vmem:[#allocation2 + $0x20] sm:$0xff] %v827
      %844 = vst [vmem:[#allocation2 + $0x28] sm:$0xff] %v828
      %845 = vst [vmem:[#allocation2 + $0x30] sm:$0xff] %v829
      %846 = vst [vmem:[#allocation2 + $0x38] sm:$0xff] %v830
      %847 = vst [vmem:[#allocation2 + $0x40] sm:$0xff] %v831
      %848 = vst [vmem:[#allocation2 + $0x48] sm:$0xff] %v832
      %849 = vst [vmem:[#allocation2 + $0x50] sm:$0xff] %v833
      %850 = vst [vmem:[#allocation2 + $0x58] sm:$0xff] %v834
      %851 = vst [vmem:[#allocation2 + $0x60] sm:$0xff] %v835
      %852 = vst [vmem:[#allocation2 + $0x68] sm:$0xff] %v836
      %853 = vst [vmem:[#allocation2 + $0x70] sm:$0xff] %v837
      %854 = vst [vmem:[#allocation2 + $0x78] sm:$0xff] %v838
      // Predicated region
      $region37: #{cnn_forward.5} parent=31 // pred_check
        %p855 = pneg %p288
      $region38: #{cnn_forward.5} parent=31 // pred_check_branch
        %857 = sbr.rel (%p855) target = $region40
      $region39: #{cnn_forward.5} parent=31 // pred_region
        %v858 = vld [vmem:[#allocation2] sm:$0xff]
        %v859 = vld [vmem:[#allocation2 + $0x8] sm:$0xff]
        %v860 = vld [vmem:[#allocation2 + $0x10] sm:$0xff]
        %v861 = vld [vmem:[#allocation2 + $0x18] sm:$0xff]
        %v862 = vld [vmem:[#allocation2 + $0x20] sm:$0xff]
        %v863 = vld [vmem:[#allocation2 + $0x28] sm:$0xff]
        %v864 = vld [vmem:[#allocation2 + $0x30] sm:$0xff]
        %v865 = vld [vmem:[#allocation2 + $0x38] sm:$0xff]
        %v866 = vld [vmem:[#allocation2 + $0x40] sm:$0xff]
        %v867 = vld [vmem:[#allocation2 + $0x48] sm:$0xff]
        %v868 = vld [vmem:[#allocation2 + $0x50] sm:$0xff]
        %v869 = vld [vmem:[#allocation2 + $0x58] sm:$0xff]
        %v870 = vld [vmem:[#allocation2 + $0x60] sm:$0xff]
        %v871 = vld [vmem:[#allocation2 + $0x68] sm:$0xff]
        %v872 = vld [vmem:[#allocation2 + $0x70] sm:$0xff]
        %v873 = vld [vmem:[#allocation2 + $0x78] sm:$0xff]
        %v874 = vld [vmem:[%s278] sm:$0x1]
        %v876 = vperm.slane %v874, 0
        %v878 = vadd.f32 %v858, %v876
        %v879 = vadd.f32 %v859, %v876
        %v880 = vadd.f32 %v860, %v876
        %v881 = vadd.f32 %v861, %v876
        %v882 = vadd.f32 %v862, %v876
        %v883 = vadd.f32 %v863, %v876
        %v884 = vadd.f32 %v864, %v876
        %v885 = vadd.f32 %v865, %v876
        %v886 = vadd.f32 %v866, %v876
        %v887 = vadd.f32 %v867, %v876
        %v888 = vadd.f32 %v868, %v876
        %v889 = vadd.f32 %v869, %v876
        %v890 = vadd.f32 %v870, %v876
        %v891 = vadd.f32 %v871, %v876
        %v892 = vadd.f32 %v872, %v876
        %v893 = vadd.f32 %v873, %v876
        %v894 = vmax.f32 %v878, 0.0
        %v895 = vmax.f32 %v879, 0.0
        %v896 = vmax.f32 %v880, 0.0
        %v897 = vmax.f32 %v881, 0.0
        %v898 = vmax.f32 %v882, 0.0
        %v899 = vmax.f32 %v883, 0.0
        %v900 = vmax.f32 %v884, 0.0
        %v901 = vmax.f32 %v885, 0.0
        %v902 = vmax.f32 %v886, 0.0
        %v903 = vmax.f32 %v887, 0.0
        %v904 = vmax.f32 %v888, 0.0
        %v905 = vmax.f32 %v889, 0.0
        %v906 = vmax.f32 %v890, 0.0
        %v907 = vmax.f32 %v891, 0.0
        %v908 = vmax.f32 %v892, 0.0
        %v909 = vmax.f32 %v893, 0.0
        %v910 = vpack.c.bf16 %v894, %v894
        %v911 = vpack.c.bf16 %v895, %v895
        %v912 = vpack.c.bf16 %v896, %v896
        %v913 = vpack.c.bf16 %v897, %v897
        %v914 = vpack.c.bf16 %v898, %v898
        %v915 = vpack.c.bf16 %v899, %v899
        %v916 = vpack.c.bf16 %v900, %v900
        %v917 = vpack.c.bf16 %v901, %v901
        %v918 = vpack.c.bf16 %v902, %v902
        %v919 = vpack.c.bf16 %v903, %v903
        %v920 = vpack.c.bf16 %v904, %v904
        %v921 = vpack.c.bf16 %v905, %v905
        %v922 = vpack.c.bf16 %v906, %v906
        %v923 = vpack.c.bf16 %v907, %v907
        %v924 = vpack.c.bf16 %v908, %v908
        %v925 = vpack.c.bf16 %v909, %v909
        %p926 = scmp.eq.s32.totalorder %s22, 0
        // Predicated region
        $region41: #{cnn_forward.5} parent=39 // pred_check
          %p927 = pneg %p926
        $region42: #{cnn_forward.5} parent=39 // pred_check_branch
          %929 = sbr.rel (%p927) target = $region44
        $region43: #{cnn_forward.5} parent=39 // pred_region
          %930 = vst [vmem:[%s286] sm:$0xf] %v910
          %931 = vst [vmem:[%s286 + $0x4] sm:$0xf] %v911
          %932 = vst [vmem:[%s286 + $0x8] sm:$0xf] %v912
          %933 = vst [vmem:[%s286 + $0xc] sm:$0xf] %v913
          %934 = vst [vmem:[%s286 + $0x10] sm:$0xf] %v914
          %935 = vst [vmem:[%s286 + $0x14] sm:$0xf] %v915
          %936 = vst [vmem:[%s286 + $0x18] sm:$0xf] %v916
          %937 = vst [vmem:[%s286 + $0x1c] sm:$0xf] %v917
          %938 = vst [vmem:[%s286 + $0x20] sm:$0xf] %v918
          %939 = vst [vmem:[%s286 + $0x24] sm:$0xf] %v919
          %940 = vst [vmem:[%s286 + $0x28] sm:$0xf] %v920
          %941 = vst [vmem:[%s286 + $0x2c] sm:$0xf] %v921
          %942 = vst [vmem:[%s286 + $0x30] sm:$0xf] %v922
          %943 = vst [vmem:[%s286 + $0x34] sm:$0xf] %v923
          %944 = vst [vmem:[%s286 + $0x38] sm:$0xf] %v924
          %945 = vst [vmem:[%s286 + $0x3c] sm:$0xf] %v925
        $region44: #{cnn_forward.5} parent=39 // pred_fallthru
          _
        %p946 = scmp.gt.s32.totalorder %s22, 0
        // Predicated region
        $region45: #{cnn_forward.5} parent=39 // pred_check
          %p947 = pneg %p946
        $region46: #{cnn_forward.5} parent=39 // pred_check_branch
          %949 = sbr.rel (%p947) target = $region48
        $region47: #{cnn_forward.5} parent=39 // pred_region
          %v950 = vld [vmem:[%s286] sm:$0xf]
          %v951 = vld [vmem:[%s286 + $0x4] sm:$0xf]
          %v952 = vld [vmem:[%s286 + $0x8] sm:$0xf]
          %v953 = vld [vmem:[%s286 + $0xc] sm:$0xf]
          %v954 = vld [vmem:[%s286 + $0x10] sm:$0xf]
          %v955 = vld [vmem:[%s286 + $0x14] sm:$0xf]
          %v956 = vld [vmem:[%s286 + $0x18] sm:$0xf]
          %v957 = vld [vmem:[%s286 + $0x1c] sm:$0xf]
          %v958 = vld [vmem:[%s286 + $0x20] sm:$0xf]
          %v959 = vld [vmem:[%s286 + $0x24] sm:$0xf]
          %v960 = vld [vmem:[%s286 + $0x28] sm:$0xf]
          %v961 = vld [vmem:[%s286 + $0x2c] sm:$0xf]
          %v962 = vld [vmem:[%s286 + $0x30] sm:$0xf]
          %v963 = vld [vmem:[%s286 + $0x34] sm:$0xf]
          %v964 = vld [vmem:[%s286 + $0x38] sm:$0xf]
          %v965 = vld [vmem:[%s286 + $0x3c] sm:$0xf]
          %v966 = vunpack.c.l.bf16 %v950
          %v967 = vunpack.c.l.bf16 %v951
          %v968 = vunpack.c.l.bf16 %v952
          %v969 = vunpack.c.l.bf16 %v953
          %v970 = vunpack.c.l.bf16 %v954
          %v971 = vunpack.c.l.bf16 %v955
          %v972 = vunpack.c.l.bf16 %v956
          %v973 = vunpack.c.l.bf16 %v957
          %v974 = vunpack.c.l.bf16 %v958
          %v975 = vunpack.c.l.bf16 %v959
          %v976 = vunpack.c.l.bf16 %v960
          %v977 = vunpack.c.l.bf16 %v961
          %v978 = vunpack.c.l.bf16 %v962
          %v979 = vunpack.c.l.bf16 %v963
          %v980 = vunpack.c.l.bf16 %v964
          %v981 = vunpack.c.l.bf16 %v965
          %v982 = vunpack.c.l.bf16 %v910
          %v983 = vunpack.c.l.bf16 %v911
          %v984 = vunpack.c.l.bf16 %v912
          %v985 = vunpack.c.l.bf16 %v913
          %v986 = vunpack.c.l.bf16 %v914
          %v987 = vunpack.c.l.bf16 %v915
          %v988 = vunpack.c.l.bf16 %v916
          %v989 = vunpack.c.l.bf16 %v917
          %v990 = vunpack.c.l.bf16 %v918
          %v991 = vunpack.c.l.bf16 %v919
          %v992 = vunpack.c.l.bf16 %v920
          %v993 = vunpack.c.l.bf16 %v921
          %v994 = vunpack.c.l.bf16 %v922
          %v995 = vunpack.c.l.bf16 %v923
          %v996 = vunpack.c.l.bf16 %v924
          %v997 = vunpack.c.l.bf16 %v925
          %v998 = vmax.f32 %v966, %v982
          %v999 = vmax.f32 %v967, %v983
          %v1000 = vmax.f32 %v968, %v984
          %v1001 = vmax.f32 %v969, %v985
          %v1002 = vmax.f32 %v970, %v986
          %v1003 = vmax.f32 %v971, %v987
          %v1004 = vmax.f32 %v972, %v988
          %v1005 = vmax.f32 %v973, %v989
          %v1006 = vmax.f32 %v974, %v990
          %v1007 = vmax.f32 %v975, %v991
          %v1008 = vmax.f32 %v976, %v992
          %v1009 = vmax.f32 %v977, %v993
          %v1010 = vmax.f32 %v978, %v994
          %v1011 = vmax.f32 %v979, %v995
          %v1012 = vmax.f32 %v980, %v996
          %v1013 = vmax.f32 %v981, %v997
          %v1014 = vpack.c.bf16 %v998, %v998
          %v1015 = vpack.c.bf16 %v999, %v999
          %v1016 = vpack.c.bf16 %v1000, %v1000
          %v1017 = vpack.c.bf16 %v1001, %v1001
          %v1018 = vpack.c.bf16 %v1002, %v1002
          %v1019 = vpack.c.bf16 %v1003, %v1003
          %v1020 = vpack.c.bf16 %v1004, %v1004
          %v1021 = vpack.c.bf16 %v1005, %v1005
          %v1022 = vpack.c.bf16 %v1006, %v1006
          %v1023 = vpack.c.bf16 %v1007, %v1007
          %v1024 = vpack.c.bf16 %v1008, %v1008
          %v1025 = vpack.c.bf16 %v1009, %v1009
          %v1026 = vpack.c.bf16 %v1010, %v1010
          %v1027 = vpack.c.bf16 %v1011, %v1011
          %v1028 = vpack.c.bf16 %v1012, %v1012
          %v1029 = vpack.c.bf16 %v1013, %v1013
          %1030 = vst [vmem:[%s286] sm:$0xf] %v1014
          %1031 = vst [vmem:[%s286 + $0x4] sm:$0xf] %v1015
          %1032 = vst [vmem:[%s286 + $0x8] sm:$0xf] %v1016
          %1033 = vst [vmem:[%s286 + $0xc] sm:$0xf] %v1017
          %1034 = vst [vmem:[%s286 + $0x10] sm:$0xf] %v1018
          %1035 = vst [vmem:[%s286 + $0x14] sm:$0xf] %v1019
          %1036 = vst [vmem:[%s286 + $0x18] sm:$0xf] %v1020
          %1037 = vst [vmem:[%s286 + $0x1c] sm:$0xf] %v1021
          %1038 = vst [vmem:[%s286 + $0x20] sm:$0xf] %v1022
          %1039 = vst [vmem:[%s286 + $0x24] sm:$0xf] %v1023
          %1040 = vst [vmem:[%s286 + $0x28] sm:$0xf] %v1024
          %1041 = vst [vmem:[%s286 + $0x2c] sm:$0xf] %v1025
          %1042 = vst [vmem:[%s286 + $0x30] sm:$0xf] %v1026
          %1043 = vst [vmem:[%s286 + $0x34] sm:$0xf] %v1027
          %1044 = vst [vmem:[%s286 + $0x38] sm:$0xf] %v1028
          %1045 = vst [vmem:[%s286 + $0x3c] sm:$0xf] %v1029
        $region48: #{cnn_forward.5} parent=39 // pred_fallthru
          _
      $region40: #{cnn_forward.5} parent=31 // pred_fallthru
        _
      %s1046 = smul.u32 16, %s20
      %p1047 = scmp.lt.s32.totalorder %s1046, 47
      %s1048 = scalar_select %p1047, %s1046, 47
      %p1049 = scmp.lt.s32.totalorder %s21, 0
      %s1050 = scalar_select %p1049, %s21, 0
      %s1051 = sadd.s32 %s1050, %s1048
      %s1052 = smul.addr %s1051, 4
      %s1053 = scalar_lea.vmem %s3, %s1052
      // Predicated region
      $region49: #{cnn_forward.5} parent=31 // pred_check
        %p1054 = pneg %p144
      $region50: #{cnn_forward.5} parent=31 // pred_check_branch
        %1056 = sbr.rel (%p1054) target = $region52
      $region51: #{cnn_forward.5} parent=31 // pred_region
        %s1057 = smul.u32 16, %s20
      $region52: #{cnn_forward.5} parent=31 // pred_fallthru
        _
    $region32: #{cnn_forward.5} parent=5 // pred_fallthru
      _
    %p1058 = scmp.le.s32.totalorder 2, %s9
    // Predicated region
    $region53: #{cnn_forward.5} parent=5 // pred_check
      %p1059 = pneg %p1058
    $region54: #{cnn_forward.5} parent=5 // pred_check_branch
      %1061 = sbr.rel (%p1059) target = $region56
    $region55: #{cnn_forward.5} parent=5 // pred_region
      %s1062 = ssub.s32 %s9, 2
      // Predicated region
      $region57: #{cnn_forward.5} parent=55 // pred_check
        %p1063 = pneg %p150
      $region58: #{cnn_forward.5} parent=55 // pred_check_branch
        %1065 = sbr.rel (%p1063) target = $region60
      $region59: #{cnn_forward.5} parent=55 // pred_region
        %s1066 = smul.u32 16, %s24
        %p1067 = scmp.lt.s32.totalorder %s1066, 47
        %s1068 = scalar_select %p1067, %s1066, 47
        %p1069 = scmp.lt.s32.totalorder %s25, 0
        %s1070 = scalar_select %p1069, %s25, 0
        %s1071 = sadd.s32 %s1070, %s1068
        %s1072 = smul.addr %s1071, 4
        %s1073 = scalar_lea.vmem %s3, %s1072
      $region60: #{cnn_forward.5} parent=55 // pred_fallthru
        _
    $region56: #{cnn_forward.5} parent=5 // pred_fallthru
      _
  $region6: #{cnn_forward.5} parent=0 // loop_footer
    %s13 = sadd.s32 1, %s9
  $region7: #{cnn_forward.5} parent=0 // loop_footer_branch
    %8 = sbr.rel target = $region3
  $region8: #{cnn_forward.5} parent=0 // loop_exit
    _

// kernel: cnn_forward.6
$region0: #{cnn_forward.6}
  #allocation0 [shape = 'u32[]', space=smem, size = 0x4, offset = 0x4, fixed_abs, tag = 'smem constant byte address 0x4 - core index']
  #allocation1 [shape = 'u32[72,128]{1,0:T(1,128)}', space=vmem, size = 0x9000, scoped, tag = 'internal scratch']
  #allocation2 [shape = 'f32[8,128]{1,0:T(8,128)}', space=vmem, size = 0x1000, scoped, tag = 'scratch operand']
  %s0 = inlined_call_operand.vmem [shape: bf16[1,8,9216], index: 0, kind: input, shape index: {}]
  %s1 = inlined_call_operand.vmem [shape: bf16[9216,128], index: 1, kind: input, shape index: {}]
  %s2 = inlined_call_operand.vmem [shape: f32[1,128], index: 2, kind: input, shape index: {}]
  %s3 = inlined_call_operand.vmem [shape: bf16[8,128], index: 3, kind: output, shape index: {}]
  %s4 = sld [smem:[#allocation0]]
  $region61: #{cnn_forward.6} parent=0
    _
  %s6 = ssub.s32 1, %s4
  %s7 = scalar_select 0, %s6, %s4
  loop: start=0, step=1, limit=20
  $region2: #{cnn_forward.6} parent=0 // loop_pre_header
    _
  $region3: #{cnn_forward.6} parent=0 // loop_header
    %s9 = sphi 0, %s13
    %p10 = scmp.ge.s32.totalorder %s9, 20
    %s16 = sphi 0, %s42
    %s17 = sphi 0, %s38
    %s18 = sphi 0, %s34
    %s19 = sphi 0, %s30
    %s20 = sphi 0, %s16
    %s21 = sphi 0, %s17
    %s22 = sphi 0, %s18
    %s23 = sphi 0, %s19
    %s24 = sphi 0, %s20
    %s25 = sphi 0, %s21
    %s26 = sphi 0, %s22
    %s27 = sphi 0, %s23
    %s49 = sphi 0, %s51
    %s52 = sphi 0, %s49
    %s53 = sphi 0, %s52
    %s69 = sphi 0, %s53
    %s77 = sphi 0, %s79
    %s80 = sphi 0, %s77
    %s81 = sphi 0, %s80
    %s97 = sphi 0, %s81
    %s103 = sphi 0, %s105
    %s106 = sphi 0, %s103
    %s107 = sphi 0, %s106
    %s123 = sphi 0, %s107
    %s131 = sphi 0, %s133
    %s134 = sphi 0, %s131
    %s135 = sphi 0, %s134
    %s151 = sphi 0, %s135
  $region4: #{cnn_forward.6} parent=0 // loop_header_branch
    %12 = sbr.rel (%p10) target = $region8
  $region5: #{cnn_forward.6} parent=0 // loop_body
    %s14 = ssub.s32 %s9, 1
    %s15 = ssub.s32 %s9, 2
    %s28 = sadd.s32 1, %s19
    %p29 = scmp.ge.s32.totalorder %s28, 18
    %s30 = scalar_select %p29, 0, %s28
    %s31 = sadd.s32 1, %s18
    %s32 = scalar_select %p29, %s31, %s18
    %p33 = scmp.ge.s32.totalorder %s32, 1
    %s34 = scalar_select %p33, 0, %s32
    %s35 = sadd.s32 1, %s17
    %s36 = scalar_select %p33, %s35, %s17
    %p37 = scmp.ge.s32.totalorder %s36, 1
    %s38 = scalar_select %p37, 0, %s36
    %s39 = sadd.s32 1, %s16
    %s40 = scalar_select %p37, %s39, %s16
    %p41 = scmp.ge.s32.totalorder %s40, 1
    %s42 = scalar_select %p41, 0, %s40
    %s43 = ssub.s32 %s18, %s34
    %s44 = ssub.s32 %s16, %s42
    %s45 = sor.u32 %s43, %s44
    %s46 = ssub.s32 %s19, %s30
    %s47 = sor.u32 %s45, %s46
    %p48 = scmp.eq.s32.totalorder %s47, 0
    %s50 = sadd.s32 %s49, 1
    %s51 = scalar_select %p48, %s49, %s50
    %p54 = pneg %p48
    %p55 = scmp.eq.s32.totalorder %s9, 17
    %p56 = por %p54, %p55
    %p57 = scmp.ne.s32.totalorder %s49, %s52
    %p58 = scmp.eq.s32.totalorder %s9, 0
    %p59 = por %p57, %p58
    %p60 = scmp.ne.s32.totalorder %s49, %s52
    %p61 = scmp.eq.s32.totalorder %s14, 17
    %p62 = por %p60, %p61
    %p63 = scmp.ne.s32.totalorder %s52, %s53
    %p64 = scmp.eq.s32.totalorder %s14, 0
    %p65 = por %p63, %p64
    %p66 = scmp.ne.s32.totalorder %s52, %s53
    %p67 = scmp.eq.s32.totalorder %s15, 17
    %p68 = por %p66, %p67
    %p70 = scmp.ne.s32.totalorder %s53, %s69
    %p71 = scmp.eq.s32.totalorder %s15, 0
    %p72 = por %p70, %p71
    %s73 = ssub.s32 %s19, %s30
    %s74 = ssub.s32 %s17, %s38
    %s75 = sor.u32 %s73, %s74
    %p76 = scmp.eq.s32.totalorder %s75, 0
    %s78 = sadd.s32 %s77, 1
    %s79 = scalar_select %p76, %s77, %s78
    %p82 = pneg %p76
    %p83 = scmp.eq.s32.totalorder %s9, 17
    %p84 = por %p82, %p83
    %p85 = scmp.ne.s32.totalorder %s77, %s80
    %p86 = scmp.eq.s32.totalorder %s9, 0
    %p87 = por %p85, %p86
    %p88 = scmp.ne.s32.totalorder %s77, %s80
    %p89 = scmp.eq.s32.totalorder %s14, 17
    %p90 = por %p88, %p89
    %p91 = scmp.ne.s32.totalorder %s80, %s81
    %p92 = scmp.eq.s32.totalorder %s14, 0
    %p93 = por %p91, %p92
    %p94 = scmp.ne.s32.totalorder %s80, %s81
    %p95 = scmp.eq.s32.totalorder %s15, 17
    %p96 = por %p94, %p95
    %p98 = scmp.ne.s32.totalorder %s81, %s97
    %p99 = scmp.eq.s32.totalorder %s15, 0
    %p100 = por %p98, %p99
    %s101 = ssub.s32 %s17, %s38
    %p102 = scmp.eq.s32.totalorder %s101, 0
    %s104 = sadd.s32 %s103, 1
    %s105 = scalar_select %p102, %s103, %s104
    %p108 = pneg %p102
    %p109 = scmp.eq.s32.totalorder %s9, 17
    %p110 = por %p108, %p109
    %p111 = scmp.ne.s32.totalorder %s103, %s106
    %p112 = scmp.eq.s32.totalorder %s9, 0
    %p113 = por %p111, %p112
    %p114 = scmp.ne.s32.totalorder %s103, %s106
    %p115 = scmp.eq.s32.totalorder %s14, 17
    %p116 = por %p114, %p115
    %p117 = scmp.ne.s32.totalorder %s106, %s107
    %p118 = scmp.eq.s32.totalorder %s14, 0
    %p119 = por %p117, %p118
    %p120 = scmp.ne.s32.totalorder %s106, %s107
    %p121 = scmp.eq.s32.totalorder %s15, 17
    %p122 = por %p120, %p121
    %p124 = scmp.ne.s32.totalorder %s107, %s123
    %p125 = scmp.eq.s32.totalorder %s15, 0
    %p126 = por %p124, %p125
    %s127 = ssub.s32 %s16, %s42
    %s128 = ssub.s32 %s17, %s38
    %s129 = sor.u32 %s127, %s128
    %p130 = scmp.eq.s32.totalorder %s129, 0
    %s132 = sadd.s32 %s131, 1
    %s133 = scalar_select %p130, %s131, %s132
    %p136 = pneg %p130
    %p137 = scmp.eq.s32.totalorder %s9, 17
    %p138 = por %p136, %p137
    %p139 = scmp.ne.s32.totalorder %s131, %s134
    %p140 = scmp.eq.s32.totalorder %s9, 0
    %p141 = por %p139, %p140
    %p142 = scmp.ne.s32.totalorder %s131, %s134
    %p143 = scmp.eq.s32.totalorder %s14, 17
    %p144 = por %p142, %p143
    %p145 = scmp.ne.s32.totalorder %s134, %s135
    %p146 = scmp.eq.s32.totalorder %s14, 0
    %p147 = por %p145, %p146
    %p148 = scmp.ne.s32.totalorder %s134, %s135
    %p149 = scmp.eq.s32.totalorder %s15, 17
    %p150 = por %p148, %p149
    %p152 = scmp.ne.s32.totalorder %s135, %s151
    %p153 = scmp.eq.s32.totalorder %s15, 0
    %p154 = por %p152, %p153
    %p155 = scmp.le.s32.totalorder 1, %s9
    %p156 = scmp.lt.s32.totalorder %s9, 19
    %p157 = pnand %p155, %p156
    %p158 = pneg %p157
    // Predicated region
    $region9: #{cnn_forward.6} parent=5 // pred_check
      _
    $region10: #{cnn_forward.6} parent=5 // pred_check_branch
      %160 = sbr.rel (%p157) target = $region12
    $region11: #{cnn_forward.6} parent=5 // pred_region
      %s161 = ssub.s32 %s9, 1
      // Predicated region
      $region13: #{cnn_forward.6} parent=11 // pred_check
        %p162 = pneg %p119
      $region14: #{cnn_forward.6} parent=11 // pred_check_branch
        %164 = sbr.rel (%p162) target = $region16
      $region15: #{cnn_forward.6} parent=11 // pred_region
        %p165 = scmp.lt.s32.totalorder %s21, 0
        %s166 = scalar_select %p165, %s21, 0
        %s167 = scalar_lea.vmem %s2, %s166
      $region16: #{cnn_forward.6} parent=11 // pred_fallthru
        _
    $region12: #{cnn_forward.6} parent=5 // pred_fallthru
      _
    %p168 = scmp.lt.s32.totalorder %s9, 18
    // Predicated region
    $region17: #{cnn_forward.6} parent=5 // pred_check
      %p169 = pneg %p168
    $region18: #{cnn_forward.6} parent=5 // pred_check_branch
      %171 = sbr.rel (%p169) target = $region20
    $region19: #{cnn_forward.6} parent=5 // pred_region
      // Predicated region
      $region21: #{cnn_forward.6} parent=19 // pred_check
        %p172 = pneg %p59
      $region22: #{cnn_forward.6} parent=19 // pred_check_branch
        %174 = sbr.rel (%p172) target = $region24
      $region23: #{cnn_forward.6} parent=19 // pred_region
        %s175 = smul.u32 4, %s19
        %p176 = scmp.lt.s32.totalorder %s18, 0
        %s177 = scalar_select %p176, %s18, 0
        %p178 = scmp.lt.s32.totalorder %s16, 0
        %s179 = scalar_select %p178, %s16, 0
        %p180 = scmp.lt.s32.totalorder %s175, 71
        %s181 = scalar_select %p180, %s175, 71
        %s182 = smul.addr %s179, 72
        %s183 = sadd.s32 %s181, %s182
        %s184 = smul.addr %s177, 72
        %s185 = sadd.s32 %s183, %s184
        %s186 = smul.addr %s185, 4
        %s187 = scalar_lea.vmem %s0, %s186
        %s188 = smul.u32 4, %s19
      $region24: #{cnn_forward.6} parent=19 // pred_fallthru
        _
      // Predicated region
      $region25: #{cnn_forward.6} parent=19 // pred_check
        %p189 = pneg %p87
      $region26: #{cnn_forward.6} parent=19 // pred_check_branch
        %191 = sbr.rel (%p189) target = $region28
      $region27: #{cnn_forward.6} parent=19 // pred_region
        %s192 = smul.u32 64, %s19
        %p193 = scmp.lt.s32.totalorder %s192, 1151
        %s194 = scalar_select %p193, %s192, 1151
        %p195 = scmp.lt.s32.totalorder %s17, 0
        %s196 = scalar_select %p195, %s17, 0
        %s197 = sadd.s32 %s196, %s194
        %s198 = smul.addr %s197, 4
        %s199 = scalar_lea.vmem %s1, %s198
        %s200 = smul.u32 64, %s19
      $region28: #{cnn_forward.6} parent=19 // pred_fallthru
        _
    $region20: #{cnn_forward.6} parent=5 // pred_fallthru
      _
    %p201 = scmp.le.s32.totalorder 1, %s9
    %p202 = scmp.lt.s32.totalorder %s9, 19
    %p203 = pnand %p201, %p202
    %p204 = pneg %p203
    // Predicated region
    $region29: #{cnn_forward.6} parent=5 // pred_check
      _
    $region30: #{cnn_forward.6} parent=5 // pred_check_branch
      %206 = sbr.rel (%p203) target = $region32
    $region31: #{cnn_forward.6} parent=5 // pred_region
      %s207 = ssub.s32 %s9, 1
      %s208 = smul.u32 4, %s23
      %p209 = scmp.lt.s32.totalorder %s22, 0
      %s210 = scalar_select %p209, %s22, 0
      %p211 = scmp.lt.s32.totalorder %s20, 0
      %s212 = scalar_select %p211, %s20, 0
      %p213 = scmp.lt.s32.totalorder %s208, 71
      %s214 = scalar_select %p213, %s208, 71
      %s215 = smul.addr %s212, 72
      %s216 = sadd.s32 %s214, %s215
      %s217 = smul.addr %s210, 72
      %s218 = sadd.s32 %s216, %s217
      %s219 = smul.addr %s218, 4
      %s220 = scalar_lea.vmem %s0, %s219
      %p221 = pneg %p65
      %p222 = pneg %p62
      %s223 = smul.u32 64, %s23
      %p224 = scmp.lt.s32.totalorder %s223, 1151
      %s225 = scalar_select %p224, %s223, 1151
      %p226 = scmp.lt.s32.totalorder %s21, 0
      %s227 = scalar_select %p226, %s21, 0
      %s228 = sadd.s32 %s227, %s225
      %s229 = smul.addr %s228, 4
      %s230 = scalar_lea.vmem %s1, %s229
      %p231 = pneg %p93
      %p232 = pneg %p90
      %p233 = scmp.lt.s32.totalorder %s21, 0
      %s234 = scalar_select %p233, %s21, 0
      %s235 = scalar_lea.vmem %s2, %s234
      %p236 = pneg %p119
      %p237 = pneg %p116
      %p238 = pneg %p147
      %p239 = pneg %p144
      %p240 = scmp.lt.s32.totalorder %s20, 0
      %s241 = scalar_select %p240, %s20, 0
      %p242 = scmp.lt.s32.totalorder %s21, 0
      %s243 = scalar_select %p242, %s21, 0
      %s244 = sadd.s32 %s243, %s241
      %s245 = smul.addr %s244, 4
      %s246 = scalar_lea.vmem %s3, %s245
      %s247 = smul.u32 4, %s23
      %p248 = scmp.lt.s32.totalorder %s22, 0
      %s249 = scalar_select %p248, %s22, 0
      %p250 = scmp.lt.s32.totalorder %s20, 0
      %s251 = scalar_select %p250, %s20, 0
      %p252 = scmp.lt.s32.totalorder %s247, 71
      %s253 = scalar_select %p252, %s247, 71
      %s254 = smul.addr %s251, 72
      %s255 = sadd.s32 %s253, %s254
      %s256 = smul.addr %s249, 72
      %s257 = sadd.s32 %s255, %s256
      %s258 = smul.addr %s257, 4
      %s259 = scalar_lea.vmem %s0, %s258
      %s260 = smul.u32 4, %s23
      %s261 = smul.u32 64, %s23
      %p262 = scmp.lt.s32.totalorder %s261, 1151
      %s263 = scalar_select %p262, %s261, 1151
      %p264 = scmp.lt.s32.totalorder %s21, 0
      %s265 = scalar_select %p264, %s21, 0
      %s266 = sadd.s32 %s265, %s263
      %s267 = smul.addr %s266, 4
      %s268 = scalar_lea.vmem %s1, %s267
      %s269 = smul.u32 64, %s23
      %p270 = scmp.lt.s32.totalorder %s21, 0
      %s271 = scalar_select %p270, %s21, 0
      %s272 = scalar_lea.vmem %s2, %s271
      %p273 = scmp.lt.s32.totalorder %s20, 0
      %s274 = scalar_select %p273, %s20, 0
      %p275 = scmp.lt.s32.totalorder %s21, 0
      %s276 = scalar_select %p275, %s21, 0
      %s277 = sadd.s32 %s276, %s274
      %s278 = smul.addr %s277, 4
      %s279 = scalar_lea.vmem %s3, %s278
      %p280 = scmp.eq.s32.totalorder %s23, 0
      // Predicated region
      $region33: #{cnn_forward.6} parent=31 // pred_check
        %p281 = pneg %p280
      $region34: #{cnn_forward.6} parent=31 // pred_check_branch
        %283 = sbr.rel (%p281) target = $region36
      $region35: #{cnn_forward.6} parent=31 // pred_region
        %284 = vst [vmem:[#allocation2] sm:$0xff] 0.0
      $region36: #{cnn_forward.6} parent=31 // pred_fallthru
        _
      %v285 = vld [vmem:[#allocation2] sm:$0xff]
      %v286 = vld [vmem:[%s259] sm:$0xff]
      %v287 = vld [vmem:[%s259 + $0x8] sm:$0xff]
      %v288 = vld [vmem:[%s268] sm:$0xf]
      %v289 = vld [vmem:[%s268 + $0x4] sm:$0xf]
      %v290 = vld [vmem:[%s268 + $0x8] sm:$0xf]
      %v291 = vld [vmem:[%s268 + $0xc] sm:$0xf]
      %v292 = vld [vmem:[%s268 + $0x10] sm:$0xf]
      %v293 = vld [vmem:[%s268 + $0x14] sm:$0xf]
      %v294 = vld [vmem:[%s268 + $0x18] sm:$0xf]
      %v295 = vld [vmem:[%s268 + $0x1c] sm:$0xf]
      %v296 = vld [vmem:[%s268 + $0x20] sm:$0xf]
      %v297 = vld [vmem:[%s268 + $0x24] sm:$0xf]
      %v298 = vld [vmem:[%s268 + $0x28] sm:$0xf]
      %v299 = vld [vmem:[%s268 + $0x2c] sm:$0xf]
      %v300 = vld [vmem:[%s268 + $0x30] sm:$0xf]
      %v301 = vld [vmem:[%s268 + $0x34] sm:$0xf]
      %v302 = vld [vmem:[%s268 + $0x38] sm:$0xf]
      %v303 = vld [vmem:[%s268 + $0x3c] sm:$0xf]
      %v304 = vld [vmem:[%s268 + $0x40] sm:$0xf]
      %v305 = vld [vmem:[%s268 + $0x44] sm:$0xf]
      %v306 = vld [vmem:[%s268 + $0x48] sm:$0xf]
      %v307 = vld [vmem:[%s268 + $0x4c] sm:$0xf]
      %v308 = vld [vmem:[%s268 + $0x50] sm:$0xf]
      %v309 = vld [vmem:[%s268 + $0x54] sm:$0xf]
      %v310 = vld [vmem:[%s268 + $0x58] sm:$0xf]
      %v311 = vld [vmem:[%s268 + $0x5c] sm:$0xf]
      %v312 = vld [vmem:[%s268 + $0x60] sm:$0xf]
      %v313 = vld [vmem:[%s268 + $0x64] sm:$0xf]
      %v314 = vld [vmem:[%s268 + $0x68] sm:$0xf]
      %v315 = vld [vmem:[%s268 + $0x6c] sm:$0xf]
      %v316 = vld [vmem:[%s268 + $0x70] sm:$0xf]
      %v317 = vld [vmem:[%s268 + $0x74] sm:$0xf]
      %v318 = vld [vmem:[%s268 + $0x78] sm:$0xf]
      %v319 = vld [vmem:[%s268 + $0x7c] sm:$0xf]
      %v320 = vld [vmem:[%s268 + $0x80] sm:$0xf]
      %v321 = vld [vmem:[%s268 + $0x84] sm:$0xf]
      %v322 = vld [vmem:[%s268 + $0x88] sm:$0xf]
      %v323 = vld [vmem:[%s268 + $0x8c] sm:$0xf]
      %v324 = vld [vmem:[%s268 + $0x90] sm:$0xf]
      %v325 = vld [vmem:[%s268 + $0x94] sm:$0xf]
      %v326 = vld [vmem:[%s268 + $0x98] sm:$0xf]
      %v327 = vld [vmem:[%s268 + $0x9c] sm:$0xf]
      %v328 = vld [vmem:[%s268 + $0xa0] sm:$0xf]
      %v329 = vld [vmem:[%s268 + $0xa4] sm:$0xf]
      %v330 = vld [vmem:[%s268 + $0xa8] sm:$0xf]
      %v331 = vld [vmem:[%s268 + $0xac] sm:$0xf]
      %v332 = vld [vmem:[%s268 + $0xb0] sm:$0xf]
      %v333 = vld [vmem:[%s268 + $0xb4] sm:$0xf]
      %v334 = vld [vmem:[%s268 + $0xb8] sm:$0xf]
      %v335 = vld [vmem:[%s268 + $0xbc] sm:$0xf]
      %v336 = vld [vmem:[%s268 + $0xc0] sm:$0xf]
      %v337 = vld [vmem:[%s268 + $0xc4] sm:$0xf]
      %v338 = vld [vmem:[%s268 + $0xc8] sm:$0xf]
      %v339 = vld [vmem:[%s268 + $0xcc] sm:$0xf]
      %v340 = vld [vmem:[%s268 + $0xd0] sm:$0xf]
      %v341 = vld [vmem:[%s268 + $0xd4] sm:$0xf]
      %v342 = vld [vmem:[%s268 + $0xd8] sm:$0xf]
      %v343 = vld [vmem:[%s268 + $0xdc] sm:$0xf]
      %v344 = vld [vmem:[%s268 + $0xe0] sm:$0xf]
      %v345 = vld [vmem:[%s268 + $0xe4] sm:$0xf]
      %v346 = vld [vmem:[%s268 + $0xe8] sm:$0xf]
      %v347 = vld [vmem:[%s268 + $0xec] sm:$0xf]
      %v348 = vld [vmem:[%s268 + $0xf0] sm:$0xf]
      %v349 = vld [vmem:[%s268 + $0xf4] sm:$0xf]
      %v350 = vld [vmem:[%s268 + $0xf8] sm:$0xf]
      %v351 = vld [vmem:[%s268 + $0xfc] sm:$0xf]
      %v354 = vunpack.c.l.b16 %v286
      %v355 = vunpack.c.h.b16 %v286
      %v356 = vunpack.c.l.b16 %v287
      %v357 = vunpack.c.h.b16 %v287
      %v358 = vpack.c.b16 %v354, %v354
      %v359 = vpack.c.b16 %v355, %v355
      %v360 = vpack.c.b16 %v356, %v356
      %v361 = vpack.c.b16 %v357, %v357
      %v430 = vunpack.c.l.b16 %v288
      %v431 = vunpack.c.l.b16 %v289
      %v432 = vunpack.c.l.b16 %v290
      %v433 = vunpack.c.l.b16 %v291
      %v434 = vunpack.c.l.b16 %v292
      %v435 = vunpack.c.l.b16 %v293
      %v436 = vunpack.c.l.b16 %v294
      %v437 = vunpack.c.l.b16 %v295
      %v438 = vunpack.c.l.b16 %v296
      %v439 = vunpack.c.l.b16 %v297
      %v440 = vunpack.c.l.b16 %v298
      %v441 = vunpack.c.l.b16 %v299
      %v442 = vunpack.c.l.b16 %v300
      %v443 = vunpack.c.l.b16 %v301
      %v444 = vunpack.c.l.b16 %v302
      %v445 = vunpack.c.l.b16 %v303
      %v446 = vunpack.c.l.b16 %v304
      %v447 = vunpack.c.l.b16 %v305
      %v448 = vunpack.c.l.b16 %v306
      %v449 = vunpack.c.l.b16 %v307
      %v450 = vunpack.c.l.b16 %v308
      %v451 = vunpack.c.l.b16 %v309
      %v452 = vunpack.c.l.b16 %v310
      %v453 = vunpack.c.l.b16 %v311
      %v454 = vunpack.c.l.b16 %v312
      %v455 = vunpack.c.l.b16 %v313
      %v456 = vunpack.c.l.b16 %v314
      %v457 = vunpack.c.l.b16 %v315
      %v458 = vunpack.c.l.b16 %v316
      %v459 = vunpack.c.l.b16 %v317
      %v460 = vunpack.c.l.b16 %v318
      %v461 = vunpack.c.l.b16 %v319
      %v462 = vunpack.c.l.b16 %v320
      %v463 = vunpack.c.l.b16 %v321
      %v464 = vunpack.c.l.b16 %v322
      %v465 = vunpack.c.l.b16 %v323
      %v466 = vunpack.c.l.b16 %v324
      %v467 = vunpack.c.l.b16 %v325
      %v468 = vunpack.c.l.b16 %v326
      %v469 = vunpack.c.l.b16 %v327
      %v470 = vunpack.c.l.b16 %v328
      %v471 = vunpack.c.l.b16 %v329
      %v472 = vunpack.c.l.b16 %v330
      %v473 = vunpack.c.l.b16 %v331
      %v474 = vunpack.c.l.b16 %v332
      %v475 = vunpack.c.l.b16 %v333
      %v476 = vunpack.c.l.b16 %v334
      %v477 = vunpack.c.l.b16 %v335
      %v478 = vunpack.c.l.b16 %v336
      %v479 = vunpack.c.l.b16 %v337
      %v480 = vunpack.c.l.b16 %v338
      %v481 = vunpack.c.l.b16 %v339
      %v482 = vunpack.c.l.b16 %v340
      %v483 = vunpack.c.l.b16 %v341
      %v484 = vunpack.c.l.b16 %v342
      %v485 = vunpack.c.l.b16 %v343
      %v486 = vunpack.c.l.b16 %v344
      %v487 = vunpack.c.l.b16 %v345
      %v488 = vunpack.c.l.b16 %v346
      %v489 = vunpack.c.l.b16 %v347
      %v490 = vunpack.c.l.b16 %v348
      %v491 = vunpack.c.l.b16 %v349
      %v492 = vunpack.c.l.b16 %v350
      %v493 = vunpack.c.l.b16 %v351
      %v494 = vpack.c.b16 %v431, %v430
      %v495 = vpack.c.b16 %v433, %v432
      %v496 = vpack.c.b16 %v435, %v434
      %v497 = vpack.c.b16 %v437, %v436
      %v498 = vpack.c.b16 %v439, %v438
      %v499 = vpack.c.b16 %v441, %v440
      %v500 = vpack.c.b16 %v443, %v442
      %v501 = vpack.c.b16 %v445, %v444
      %v502 = vpack.c.b16 %v447, %v446
      %v503 = vpack.c.b16 %v449, %v448
      %v504 = vpack.c.b16 %v451, %v450
      %v505 = vpack.c.b16 %v453, %v452
      %v506 = vpack.c.b16 %v455, %v454
      %v507 = vpack.c.b16 %v457, %v456
      %v508 = vpack.c.b16 %v459, %v458
      %v509 = vpack.c.b16 %v461, %v460
      %v510 = vpack.c.b16 %v463, %v462
      %v511 = vpack.c.b16 %v465, %v464
      %v512 = vpack.c.b16 %v467, %v466
      %v513 = vpack.c.b16 %v469, %v468
      %v514 = vpack.c.b16 %v471, %v470
      %v515 = vpack.c.b16 %v473, %v472
      %v516 = vpack.c.b16 %v475, %v474
      %v517 = vpack.c.b16 %v477, %v476
      %v518 = vpack.c.b16 %v479, %v478
      %v519 = vpack.c.b16 %v481, %v480
      %v520 = vpack.c.b16 %v483, %v482
      %v521 = vpack.c.b16 %v485, %v484
      %v522 = vpack.c.b16 %v487, %v486
      %v523 = vpack.c.b16 %v489, %v488
      %v524 = vpack.c.b16 %v491, %v490
      %v525 = vpack.c.b16 %v493, %v492
      %558 = vmatpush.bf16.msra.mxu0 %v501
      %559 = vmatpush.bf16.msra.mxu0 %v500
      %560 = vmatpush.bf16.msra.mxu0 %v499
      %561 = vmatpush.bf16.msra.mxu0 %v498
      %562 = vmatpush.bf16.msra.mxu0 %v497
      %563 = vmatpush.bf16.msra.mxu0 %v496
      %564 = vmatpush.bf16.msra.mxu0 %v495
      %565 = vmatpush.bf16.msra.mxu0 %v494
      %566 = vmatmul.bf16.gmra.mxu0 %v358
      %v567 = vpop.f32.mrf.mxu0
      %v568 = vadd.f32 0.0, %v567
      %v569 = vpop.f32.mrf.mxu0
      %570 = vdwg.mxu0
      %571 = vmatpush.bf16.msra.mxu0 %v509
      %572 = vmatpush.bf16.msra.mxu0 %v508
      %573 = vmatpush.bf16.msra.mxu0 %v507
      %574 = vmatpush.bf16.msra.mxu0 %v506
      %575 = vmatpush.bf16.msra.mxu0 %v505
      %576 = vmatpush.bf16.msra.mxu0 %v504
      %577 = vmatpush.bf16.msra.mxu0 %v503
      %578 = vmatpush.bf16.msra.mxu0 %v502
      %579 = vmatmul.bf16.gmra.mxu0 %v359
      %v580 = vpop.f32.mrf.mxu0
      %v581 = vadd.f32 %v568, %v580
      %v582 = vpop.f32.mrf.mxu0
      %583 = vdwg.mxu0
      %584 = vmatpush.bf16.msra.mxu0 %v517
      %585 = vmatpush.bf16.msra.mxu0 %v516
      %586 = vmatpush.bf16.msra.mxu0 %v515
      %587 = vmatpush.bf16.msra.mxu0 %v514
      %588 = vmatpush.bf16.msra.mxu0 %v513
      %589 = vmatpush.bf16.msra.mxu0 %v512
      %590 = vmatpush.bf16.msra.mxu0 %v511
      %591 = vmatpush.bf16.msra.mxu0 %v510
      %592 = vmatmul.bf16.gmra.mxu0 %v360
      %v593 = vpop.f32.mrf.mxu0
      %v594 = vadd.f32 %v581, %v593
      %v595 = vpop.f32.mrf.mxu0
      %596 = vdwg.mxu0
      %597 = vmatpush.bf16.msra.mxu0 %v525
      %598 = vmatpush.bf16.msra.mxu0 %v524
      %599 = vmatpush.bf16.msra.mxu0 %v523
      %600 = vmatpush.bf16.msra.mxu0 %v522
      %601 = vmatpush.bf16.msra.mxu0 %v521
      %602 = vmatpush.bf16.msra.mxu0 %v520
      %603 = vmatpush.bf16.msra.mxu0 %v519
      %604 = vmatpush.bf16.msra.mxu0 %v518
      %605 = vmatmul.bf16.gmra.mxu0 %v361
      %v606 = vpop.f32.mrf.mxu0
      %v607 = vadd.f32 %v594, %v606
      %v608 = vpop.f32.mrf.mxu0
      %609 = vdwg.mxu0
      %v610 = vadd.f32 %v285, %v607
      %611 = vst [vmem:[#allocation2] sm:$0xff] %v610
      %p612 = scmp.eq.s32.totalorder %s23, 17
      // Predicated region
      $region37: #{cnn_forward.6} parent=31 // pred_check
        %p613 = pneg %p612
      $region38: #{cnn_forward.6} parent=31 // pred_check_branch
        %615 = sbr.rel (%p613) target = $region40
      $region39: #{cnn_forward.6} parent=31 // pred_region
        %v616 = vld [vmem:[#allocation2] sm:$0xff]
        %v617 = vld [vmem:[%s272] sm:$0x1]
        %v619 = vperm.slane %v617, 0
        %v621 = vadd.f32 %v616, %v619
        %v622 = vmax.f32 %v621, 0.0
        %v623 = vpack.c.bf16 %v622, %v622
        %p624 = scmp.eq.s32.totalorder %s22, 0
        // Predicated region
        $region41: #{cnn_forward.6} parent=39 // pred_check
          %p625 = pneg %p624
        $region42: #{cnn_forward.6} parent=39 // pred_check_branch
          %627 = sbr.rel (%p625) target = $region44
        $region43: #{cnn_forward.6} parent=39 // pred_region
          %628 = vst [vmem:[%s279] sm:$0xf] %v623
        $region44: #{cnn_forward.6} parent=39 // pred_fallthru
          _
        %p629 = scmp.gt.s32.totalorder %s22, 0
        // Predicated region
        $region45: #{cnn_forward.6} parent=39 // pred_check
          %p630 = pneg %p629
        $region46: #{cnn_forward.6} parent=39 // pred_check_branch
          %632 = sbr.rel (%p630) target = $region48
        $region47: #{cnn_forward.6} parent=39 // pred_region
          %v633 = vld [vmem:[%s279] sm:$0xf]
          %v634 = vunpack.c.l.bf16 %v633
          %v635 = vunpack.c.l.bf16 %v623
          %v636 = vmax.f32 %v634, %v635
          %v637 = vpack.c.bf16 %v636, %v636
          %638 = vst [vmem:[%s279] sm:$0xf] %v637
        $region48: #{cnn_forward.6} parent=39 // pred_fallthru
          _
      $region40: #{cnn_forward.6} parent=31 // pred_fallthru
        _
      %p639 = scmp.lt.s32.totalorder %s20, 0
      %s640 = scalar_select %p639, %s20, 0
      %p641 = scmp.lt.s32.totalorder %s21, 0
      %s642 = scalar_select %p641, %s21, 0
      %s643 = sadd.s32 %s642, %s640
      %s644 = smul.addr %s643, 4
      %s645 = scalar_lea.vmem %s3, %s644
      // Predicated region
      $region49: #{cnn_forward.6} parent=31 // pred_check
        %p646 = pneg %p144
      $region50: #{cnn_forward.6} parent=31 // pred_check_branch
        %648 = sbr.rel (%p646) target = $region52
      $region51: #{cnn_forward.6} parent=31 // pred_region
        _
      $region52: #{cnn_forward.6} parent=31 // pred_fallthru
        _
      // Predicated region
      $region53: #{cnn_forward.6} parent=31 // pred_check
        %p649 = pneg %p144
      $region54: #{cnn_forward.6} parent=31 // pred_check_branch
        %651 = sbr.rel (%p649) target = $region56
      $region55: #{cnn_forward.6} parent=31 // pred_region
        %p652 = scmp.lt.s32.totalorder %s20, 0
        %s653 = scalar_select %p652, %s20, 0
        %p654 = scmp.lt.s32.totalorder %s21, 0
        %s655 = scalar_select %p654, %s21, 0
        %s656 = sadd.s32 %s655, %s653
        %s657 = smul.addr %s656, 4
        %s658 = scalar_lea.vmem %s3, %s657
      $region56: #{cnn_forward.6} parent=31 // pred_fallthru
        _
    $region32: #{cnn_forward.6} parent=5 // pred_fallthru
      _
    %p659 = scmp.le.s32.totalorder 2, %s9
    // Predicated region
    $region57: #{cnn_forward.6} parent=5 // pred_check
      %p660 = pneg %p659
    $region58: #{cnn_forward.6} parent=5 // pred_check_branch
      %662 = sbr.rel (%p660) target = $region60
    $region59: #{cnn_forward.6} parent=5 // pred_region
      %s663 = ssub.s32 %s9, 2
    $region60: #{cnn_forward.6} parent=5 // pred_fallthru
      _
  $region6: #{cnn_forward.6} parent=0 // loop_footer
    %s13 = sadd.s32 1, %s9
  $region7: #{cnn_forward.6} parent=0 // loop_footer_branch
    %8 = sbr.rel target = $region3
  $region8: #{cnn_forward.6} parent=0 // loop_exit
    _

// kernel: cnn_forward.7
$region0: #{cnn_forward.7}
  #allocation0 [shape = 'u32[]', space=smem, size = 0x4, offset = 0x4, fixed_abs, tag = 'smem constant byte address 0x4 - core index']
  #allocation1 [shape = 'u32[72,128]{1,0:T(1,128)}', space=vmem, size = 0x9000, scoped, tag = 'internal scratch']
  #allocation2 [shape = 'f32[8,128]{1,0:T(8,128)}', space=vmem, size = 0x1000, scoped, tag = 'scratch operand']
  %s0 = inlined_call_operand.vmem [shape: bf16[1,8,128], index: 0, kind: input, shape index: {}]
  %s1 = inlined_call_operand.vmem [shape: bf16[128,128], index: 1, kind: input, shape index: {}]
  %s2 = inlined_call_operand.vmem [shape: f32[1,128], index: 2, kind: input, shape index: {}]
  %s3 = inlined_call_operand.vmem [shape: f32[8,128], index: 3, kind: output, shape index: {}]
  %s4 = sld [smem:[#allocation0]]
  $region38: #{cnn_forward.7} parent=0
    _
  %s6 = ssub.s32 1, %s4
  %s7 = scalar_select 0, %s6, %s4
  // Predicated region
  $region2: #{cnn_forward.7} parent=0 // pred_check
    _
  $region3: #{cnn_forward.7} parent=0 // pred_check_branch
    %9 = sbr.rel (0) target = $region5
  $region4: #{cnn_forward.7} parent=0 // pred_region
    _
  $region5: #{cnn_forward.7} parent=0 // pred_fallthru
    _
  // Predicated region
  $region6: #{cnn_forward.7} parent=0 // pred_check
    _
  $region7: #{cnn_forward.7} parent=0 // pred_check_branch
    %11 = sbr.rel (0) target = $region9
  $region8: #{cnn_forward.7} parent=0 // pred_region
    _
  $region9: #{cnn_forward.7} parent=0 // pred_fallthru
    _
  // Predicated region
  $region10: #{cnn_forward.7} parent=0 // pred_check
    _
  $region11: #{cnn_forward.7} parent=0 // pred_check_branch
    %13 = sbr.rel (0) target = $region13
  $region12: #{cnn_forward.7} parent=0 // pred_region
    _
  $region13: #{cnn_forward.7} parent=0 // pred_fallthru
    _
  %p14 = scmp.eq.s32.totalorder 0, 0
  // Predicated region
  $region14: #{cnn_forward.7} parent=0 // pred_check
    %p15 = pneg %p14
  $region15: #{cnn_forward.7} parent=0 // pred_check_branch
    %17 = sbr.rel (%p15) target = $region17
  $region16: #{cnn_forward.7} parent=0 // pred_region
    %18 = vst [vmem:[#allocation2] sm:$0xff] 0.0
  $region17: #{cnn_forward.7} parent=0 // pred_fallthru
    _
  %v19 = vld [vmem:[#allocation2] sm:$0xff]
  %v20 = vld [vmem:[%s0] sm:$0xf]
  %v21 = vld [vmem:[%s1] sm:$0xf]
  %v22 = vld [vmem:[%s1 + $0x4] sm:$0xf]
  %v23 = vld [vmem:[%s1 + $0x8] sm:$0xf]
  %v24 = vld [vmem:[%s1 + $0xc] sm:$0xf]
  %v25 = vld [vmem:[%s1 + $0x10] sm:$0xf]
  %v26 = vld [vmem:[%s1 + $0x14] sm:$0xf]
  %v27 = vld [vmem:[%s1 + $0x18] sm:$0xf]
  %v28 = vld [vmem:[%s1 + $0x1c] sm:$0xf]
  %v29 = vld [vmem:[%s1 + $0x20] sm:$0xf]
  %v30 = vld [vmem:[%s1 + $0x24] sm:$0xf]
  %v31 = vld [vmem:[%s1 + $0x28] sm:$0xf]
  %v32 = vld [vmem:[%s1 + $0x2c] sm:$0xf]
  %v33 = vld [vmem:[%s1 + $0x30] sm:$0xf]
  %v34 = vld [vmem:[%s1 + $0x34] sm:$0xf]
  %v35 = vld [vmem:[%s1 + $0x38] sm:$0xf]
  %v36 = vld [vmem:[%s1 + $0x3c] sm:$0xf]
  %v53 = vunpack.c.l.b16 %v21
  %v54 = vunpack.c.l.b16 %v22
  %v55 = vunpack.c.l.b16 %v23
  %v56 = vunpack.c.l.b16 %v24
  %v57 = vunpack.c.l.b16 %v25
  %v58 = vunpack.c.l.b16 %v26
  %v59 = vunpack.c.l.b16 %v27
  %v60 = vunpack.c.l.b16 %v28
  %v61 = vunpack.c.l.b16 %v29
  %v62 = vunpack.c.l.b16 %v30
  %v63 = vunpack.c.l.b16 %v31
  %v64 = vunpack.c.l.b16 %v32
  %v65 = vunpack.c.l.b16 %v33
  %v66 = vunpack.c.l.b16 %v34
  %v67 = vunpack.c.l.b16 %v35
  %v68 = vunpack.c.l.b16 %v36
  %v69 = vpack.c.b16 %v54, %v53
  %v70 = vpack.c.b16 %v56, %v55
  %v71 = vpack.c.b16 %v58, %v57
  %v72 = vpack.c.b16 %v60, %v59
  %v73 = vpack.c.b16 %v62, %v61
  %v74 = vpack.c.b16 %v64, %v63
  %v75 = vpack.c.b16 %v66, %v65
  %v76 = vpack.c.b16 %v68, %v67
  %85 = vmatpush.bf16.msra.mxu0 %v76
  %86 = vmatpush.bf16.msra.mxu0 %v75
  %87 = vmatpush.bf16.msra.mxu0 %v74
  %88 = vmatpush.bf16.msra.mxu0 %v73
  %89 = vmatpush.bf16.msra.mxu0 %v72
  %90 = vmatpush.bf16.msra.mxu0 %v71
  %91 = vmatpush.bf16.msra.mxu0 %v70
  %92 = vmatpush.bf16.msra.mxu0 %v69
  %93 = vmatmul.bf16.gmra.mxu0 %v20
  %v94 = vpop.f32.mrf.mxu0
  %v95 = vadd.f32 0.0, %v94
  %v96 = vpop.f32.mrf.mxu0
  %97 = vdwg.mxu0
  %v98 = vadd.f32 %v19, %v95
  %99 = vst [vmem:[#allocation2] sm:$0xff] %v98
  // Predicated region
  $region18: #{cnn_forward.7} parent=0 // pred_check
    %p100 = pneg %p14
  $region19: #{cnn_forward.7} parent=0 // pred_check_branch
    %102 = sbr.rel (%p100) target = $region21
  $region20: #{cnn_forward.7} parent=0 // pred_region
    %v103 = vld [vmem:[#allocation2] sm:$0xff]
    %v104 = vld [vmem:[%s2] sm:$0x1]
    %v106 = vperm.slane %v104, 0
    %v108 = vadd.f32 %v103, %v106
    %p109 = scmp.eq.s32.totalorder 0, 0
    // Predicated region
    $region22: #{cnn_forward.7} parent=20 // pred_check
      %p110 = pneg %p109
    $region23: #{cnn_forward.7} parent=20 // pred_check_branch
      %112 = sbr.rel (%p110) target = $region25
    $region24: #{cnn_forward.7} parent=20 // pred_region
      %113 = vst [vmem:[%s3] sm:$0xff] %v108
    $region25: #{cnn_forward.7} parent=20 // pred_fallthru
      _
    %p114 = scmp.gt.s32.totalorder 0, 0
    // Predicated region
    $region26: #{cnn_forward.7} parent=20 // pred_check
      %p115 = pneg %p114
    $region27: #{cnn_forward.7} parent=20 // pred_check_branch
      %117 = sbr.rel (%p115) target = $region29
    $region28: #{cnn_forward.7} parent=20 // pred_region
      %v118 = vld [vmem:[%s3] sm:$0xff]
      %v119 = vmax.f32 %v118, %v108
      %120 = vst [vmem:[%s3] sm:$0xff] %v119
    $region29: #{cnn_forward.7} parent=20 // pred_fallthru
      _
  $region21: #{cnn_forward.7} parent=0 // pred_fallthru
    _
  // Predicated region
  $region30: #{cnn_forward.7} parent=0 // pred_check
    _
  $region31: #{cnn_forward.7} parent=0 // pred_check_branch
    %122 = sbr.rel (0) target = $region33
  $region32: #{cnn_forward.7} parent=0 // pred_region
    _
  $region33: #{cnn_forward.7} parent=0 // pred_fallthru
    _
  // Predicated region
  $region34: #{cnn_forward.7} parent=0 // pred_check
    _
  $region35: #{cnn_forward.7} parent=0 // pred_check_branch
    %124 = sbr.rel (0) target = $region37
  $region36: #{cnn_forward.7} parent=0 // pred_region
    _
  $region37: #{cnn_forward.7} parent=0 // pred_fallthru
    _

</llo_original>
